<compile_context>
chip_gen: v5e
topology: v5e:2x2
jax: 0.10.0
libtpu: 0.0.40
codegen_flags: <defaults>
</compile_context>

<pallas_src>
import jax
import jax.numpy as jnp
from jax.experimental import pallas as pl
from jax.experimental.pallas import tpu as pltpu


# ----------------------------------------------------------------------------
# Generation-aware tiling / VMEM budgeting.
# ----------------------------------------------------------------------------
_VMEM_CAP_CACHE = [None]


def _vmem_capacity_bytes():
    if _VMEM_CAP_CACHE[0] is None:
        cap = 0
        try:
            info = pltpu.get_tpu_info()
            cap = int(getattr(info, "vmem_capacity_bytes", 0) or 0)
        except Exception:
            cap = 0
        # Conservative default: v7x has 64 MiB per TensorCore.
        _VMEM_CAP_CACHE[0] = cap if cap > 0 else 64 * 1024 * 1024
    return _VMEM_CAP_CACHE[0]


def _pick_row_block(n_rows, itemsize, row_block_max=256):
    """Sublane-aligned row tile giving >=2 (ideally >=4) parallel row blocks."""
    sub = max(8, 32 // max(1, itemsize))        # 8 (f32), 16 (bf16), 32 (8-bit)
    if n_rows < 2 * sub:
        return n_rows                            # single block == full dim (legal)
    target_blocks = 4 if n_rows >= 4 * sub else 2
    rb_cap = min(row_block_max, max(sub, ((n_rows // target_blocks) // sub) * sub))
    for rb in range(rb_cap, sub - 1, -sub):      # prefer a divisor of n_rows
        if n_rows % rb == 0:
            return rb
    return rb_cap


def _select_tiling(n_rows, d, frame_itemsize):
    """Returns (row_block, k_block, num_k, d_pad, lane_fold, acc_cols, vmem_limit)."""
    vmem_cap = _vmem_capacity_bytes()
    if vmem_cap >= 128 * 1024 * 1024:            # v5e / v6e: 128 MiB physical VMEM
        k_block_max = 8192
        scoped_budget = 96 * 1024 * 1024
    else:                                         # v7x: 64 MiB per TensorCore
        k_block_max = 4096
        scoped_budget = 40 * 1024 * 1024

    row_block = _pick_row_block(n_rows, frame_itemsize)
    k_block = d if d <= 128 else min(k_block_max, (d // 128) * 128)

    def working_set(rb, kb, acc_cols, d_pad):
        return (2 * 2 * rb * kb * frame_itemsize  # 2 frame streams, double-buffered
                + 2 * 2 * d_pad * 4               # 2 resident weight tables (2 bufs)
                + 2 * 2 * rb * 4                  # 2 (rb, 1) output blocks
                + 2 * rb * acc_cols * 4)          # 2 accumulator scratches

    while True:
        lane_fold = (k_block >= 128) and (k_block % 128 == 0)
        acc_cols = 128 if lane_fold else 1
        num_k = -(-d // k_block)
        d_pad = num_k * k_block
        if (working_set(row_block, k_block, acc_cols, d_pad) <= scoped_budget
                or k_block <= 128):
            break
        k_block = max(128, ((k_block // 2) // 128) * 128)

    vmem_limit = min(
        scoped_budget,
        max(32 * 1024 * 1024,
            int(working_set(row_block, k_block, acc_cols, d_pad) * 1.25)
            + 4 * 1024 * 1024))
    return row_block, k_block, num_k, d_pad, lane_fold, acc_cols, vmem_limit


# ----------------------------------------------------------------------------
# Kernel 1: fused dual-chunk PhysNet-stand-in embedding (memory-bound reduce).
#   emb_c[row] = sum_d frames_c[row, d] * w_c[d] + b_c        c in {1, 2}
# Grid: (row blocks [parallel], K blocks [arbitrary, reduction]).
# ----------------------------------------------------------------------------
def _make_embed_kernel(d, k_block, need_mask, lane_fold):
    n_fold = k_block // 128 if lane_fold else 1

    def kernel(b1_ref, b2_ref, f1_ref, w1_ref, f2_ref, w2_ref,
               o1_ref, o2_ref, acc1, acc2):
        k = pl.program_id(1)

        @pl.when(k == 0)
        def _init():
            acc1[...] = jnp.zeros_like(acc1)
            acc2[...] = jnp.zeros_like(acc2)

        if need_mask:
            col = jax.lax.broadcasted_iota(jnp.int32, (1, k_block), 1)
            valid = (k * k_block + col) < d
        else:
            valid = None

        def partial(f_ref, w_ref):
            # Resident weight table: read the current K chunk (no per-step DMA).
            w = w_ref[pl.ds(k, 1), :]                          # (1, k_block)
            p = f_ref[...].astype(jnp.float32) * w             # VPU, (rb, k_block)
            if valid is not None:
                p = jnp.where(valid, p, 0.0)                   # mask padded tail
            if lane_fold:
                # Lane-dense partial sums: fold k_block -> 128 lanes with VALU
                # adds over tile-aligned 128-wide strips (no XLU in the loop).
                parts = [p[:, j * 128:(j + 1) * 128] for j in range(n_fold)]
                while len(parts) > 1:
                    nxt = []
                    for a in range(0, len(parts) - 1, 2):
                        nxt.append(parts[a] + parts[a + 1])
                    if len(parts) % 2:
                        nxt.append(parts[-1])
                    parts = nxt
                return parts[0]                                # (rb, 128)
            return jnp.sum(p, axis=-1, keepdims=True)          # (rb, 1), tiny d

        acc1[...] += partial(f1_ref, w1_ref)
        acc2[...] += partial(f2_ref, w2_ref)

        @pl.when(k == pl.num_programs(1) - 1)
        def _finalize():
            if lane_fold:
                s1 = jnp.sum(acc1[...], axis=-1, keepdims=True)   # one XLU reduce
                s2 = jnp.sum(acc2[...], axis=-1, keepdims=True)
            else:
                s1 = acc1[...]
                s2 = acc2[...]
            o1_ref[...] = s1 + b1_ref[0, 0]
            o2_ref[...] = s2 + b2_ref[0, 0]

    return kernel


def physnet_embed_pair(video1_btchw, video2_btchw, w1, b1, w2, b2):
    """(B,T,C,H,W) x2 -> (B,T) x2 embeddings, one pipelined pallas_call."""
    B, T, C, H, W = video1_btchw.shape
    n_rows = B * T
    d = C * H * W

    # Contiguous, zero-copy flatten (the PyTorch permute + PhysNet flatten
    # compose to the identity on feature order).
    f1 = video1_btchw.reshape(n_rows, d)
    f2 = video2_btchw.reshape(n_rows, d)
    frame_itemsize = jnp.dtype(f1.dtype).itemsize

    (row_block, k_block, num_k, d_pad,
     lane_fold, acc_cols, vmem_limit) = _select_tiling(n_rows, d, frame_itemsize)

    def prep_w(w):
        w = w.astype(jnp.float32).reshape(1, d)
        if d_pad != d:
            w = jnp.pad(w, ((0, 0), (0, d_pad - d)))   # zero pad (tiny op)
        return w.reshape(num_k, k_block)

    w1r, w2r = prep_w(w1), prep_w(w2)
    b1r = b1.astype(jnp.float32).reshape(1, 1)
    b2r = b2.astype(jnp.float32).reshape(1, 1)

    need_mask = (d % k_block) != 0
    kernel = _make_embed_kernel(d, k_block, need_mask, lane_fold)

    num_row_blocks = -(-n_rows // row_block)
    grid = (num_row_blocks, num_k)

    frame_spec = pl.BlockSpec((row_block, k_block), lambda i, k: (i, k))
    weight_spec = pl.BlockSpec((num_k, k_block), lambda i, k: (0, 0))  # resident
    out_spec = pl.BlockSpec((row_block, 1), lambda i, k: (i, 0))
    smem_spec = pl.BlockSpec(memory_space=pltpu.MemorySpace.SMEM)

    o1, o2 = pl.pallas_call(
        kernel,
        out_shape=(jax.ShapeDtypeStruct((n_rows, 1), jnp.float32),
                   jax.ShapeDtypeStruct((n_rows, 1), jnp.float32)),
        grid=grid,
        in_specs=[smem_spec, smem_spec,
                  frame_spec, weight_spec, frame_spec, weight_spec],
        out_specs=(out_spec, out_spec),
        scratch_shapes=[pltpu.VMEM((row_block, acc_cols), jnp.float32),
                        pltpu.VMEM((row_block, acc_cols), jnp.float32)],
        compiler_params=pltpu.CompilerParams(
            dimension_semantics=("parallel", "arbitrary"),
            vmem_limit_bytes=vmem_limit),
    )(b1r, b2r, f1, w1r, f2, w2r)
    return o1.reshape(B, T), o2.reshape(B, T)


# ----------------------------------------------------------------------------
# Kernel 2: both MLP heads fused; torch.cat folded into a split matmul.
#   x = cat(e1, e2)                      (B, 2T)
#   h = relu(x @ W1cat + b1cat)          (B, 1024)   W1cat = [W1a | W1b]
#     = relu(e1 @ W1cat[:T] + e2 @ W1cat[T:] + b1cat)
#   o1 = h[:, :512] @ W2a + b2a ;  o2 = h[:, 512:] @ W2b + b2b
# ----------------------------------------------------------------------------
def _mlp_heads_kernel(e1_ref, e2_ref,
                      w1t_ref, w1b_ref, b1c_ref,
                      w2a_ref, b2a_ref, w2b_ref, b2b_ref,
                      o1_ref, o2_ref):
    h = (jnp.dot(e1_ref[...], w1t_ref[...], preferred_element_type=jnp.float32)
         + jnp.dot(e2_ref[...], w1b_ref[...], preferred_element_type=jnp.float32)
         + b1c_ref[...])
    h = jnp.maximum(h, 0.0)  # ReLU; Dropout(0.5) = identity (eval mode)

    hidden = w2a_ref.shape[0]          # 512 (static)
    o1_ref[...] = (jnp.dot(h[:, :hidden], w2a_ref[...],
                           preferred_element_type=jnp.float32) + b2a_ref[...])
    o2_ref[...] = (jnp.dot(h[:, hidden:], w2b_ref[...],
                           preferred_element_type=jnp.float32) + b2b_ref[...])


def mlp_heads(emb1, emb2, params):
    B = emb1.shape[0]
    mlp1_out = params["w2a"].shape[1]
    mlp2_out = params["w2b"].shape[1]
    vmem = pl.BlockSpec(memory_space=pltpu.MemorySpace.VMEM)
    return pl.pallas_call(
        _mlp_heads_kernel,
        out_shape=(jax.ShapeDtypeStruct((B, mlp1_out), jnp.float32),
                   jax.ShapeDtypeStruct((B, mlp2_out), jnp.float32)),
        in_specs=[vmem] * 9,
        out_specs=(vmem, vmem),
    )(emb1, emb2,
      params["w1cat_top"], params["w1cat_bot"], params["b1cat"],
      params["w2a"], params["b2a"], params["w2b"], params["b2b"])


# ----------------------------------------------------------------------------
# MultiPhysNetModel forward.
# ----------------------------------------------------------------------------
def multi_physnet_forward(params, video_chunk1, video_chunk2):
    # The PyTorch permute (B,T,C,H,W)->(B,C,T,H,W) and PhysNet's feature
    # flatten compose to the identity, so the video tensors pass straight
    # through (no relayout of the large tensors).
    emb1, emb2 = physnet_embed_pair(
        video_chunk1, video_chunk2,
        params["phys1_w"], params["phys1_b"],
        params["phys2_w"], params["phys2_b"])

    # torch.cat(dim=1) -> squeeze -> reshape(-1, 2T) == (B, 2T) for every B;
    # the concat is folded into the heads kernel's split matmul.
    return mlp_heads(emb1, emb2, params)


# ----------------------------------------------------------------------------
# Deterministic parameter init (PyTorch-style uniform +-1/sqrt(fan_in)).
# ----------------------------------------------------------------------------
def init_params(key, frames, c, h, w, mlp1_out, mlp2_out):
    d = c * h * w
    cat = 2 * frames
    ks = jax.random.split(key, 12)

    def u(k, shape, fan_in):
        bound = 1.0 / jnp.sqrt(float(fan_in))
        return jax.random.uniform(k, shape, jnp.float32, -bound, bound)

    w1a = u(ks[4], (cat, 512), cat)
    b1a = u(ks[5], (1, 512), cat)
    w2a = u(ks[6], (512, mlp1_out), 512)
    b2a = u(ks[7], (1, mlp1_out), 512)
    w1b = u(ks[8], (cat, 512), cat)
    b1b = u(ks[9], (1, 512), cat)
    w2b = u(ks[10], (512, mlp2_out), 512)
    b2b = u(ks[11], (1, mlp2_out), 512)

    return {
        "phys1_w": u(ks[0], (1, d), d),
        "phys1_b": u(ks[1], (1, 1), d),
        "phys2_w": u(ks[2], (1, d), d),
        "phys2_b": u(ks[3], (1, 1), d),
        # raw per-head weights (math layout; used by the pure-JAX reference)
        "w1a": w1a, "b1a": b1a, "w2a": w2a, "b2a": b2a,
        "w1b": w1b, "b1b": b1b, "w2b": w2b, "b2b": b2b,
        # host-side packing for the heads kernel: both heads' first layers
        # concatenated along the output dim and split along rows at T so
        # torch.cat(e1, e2) becomes a split matmul (no in-kernel relayout).
        "w1cat_top": jnp.concatenate([w1a[:frames], w1b[:frames]], axis=1),
        "w1cat_bot": jnp.concatenate([w1a[frames:], w1b[frames:]], axis=1),
        "b1cat": jnp.concatenate([b1a, b1b], axis=1),
    }


# ----------------------------------------------------------------------------
# Pure-JAX reference (mirrors the PyTorch forward semantics), f32/HIGHEST.
# ----------------------------------------------------------------------------
def _reference_forward(params, v1, v2):
    hp = jax.lax.Precision.HIGHEST
    B, T, C, H, W = v1.shape
    d = C * H * W
    e1 = jnp.einsum("btd,d->bt", v1.reshape(B, T, d).astype(jnp.float32),
                    params["phys1_w"][0], precision=hp) + params["phys1_b"][0, 0]
    e2 = jnp.einsum("btd,d->bt", v2.reshape(B, T, d).astype(jnp.float32),
                    params["phys2_w"][0], precision=hp) + params["phys2_b"][0, 0]
    x = jnp.concatenate([e1, e2], axis=1)
    x = jnp.squeeze(x)
    x = x.reshape(-1, 2 * T)
    h1 = jnp.maximum(jnp.dot(x, params["w1a"], precision=hp) + params["b1a"], 0.0)
    h2 = jnp.maximum(jnp.dot(x, params["w1b"], precision=hp) + params["b1b"], 0.0)
    return (jnp.dot(h1, params["w2a"], precision=hp) + params["b2a"],
            jnp.dot(h2, params["w2b"], precision=hp) + params["b2b"])


# ----------------------------------------------------------------------------
# Main: run three configurations (aligned f32, awkward d + ragged rows, bf16).
# ----------------------------------------------------------------------------
def _run_case(key, B, T, C, H, W, mlp1_out, mlp2_out,
              frame_dtype=jnp.float32, tol=1e-2):
    k_v1, k_v2, k_p = jax.random.split(key, 3)
    v1 = jax.random.normal(k_v1, (B, T, C, H, W), jnp.float32).astype(frame_dtype)
    v2 = jax.random.normal(k_v2, (B, T, C, H, W), jnp.float32).astype(frame_dtype)
    params = init_params(k_p, T, C, H, W, mlp1_out, mlp2_out)

    fwd = jax.jit(multi_physnet_forward)
    out1, out2 = fwd(params, v1, v2)
    jax.block_until_ready((out1, out2))

    assert out1.shape == (B, mlp1_out) and out2.shape == (B, mlp2_out)
    ref1, ref2 = _reference_forward(params, v1, v2)
    d1 = float(jnp.max(jnp.abs(out1 - ref1)))
    d2 = float(jnp.max(jnp.abs(out2 - ref2)))
    assert jnp.allclose(out1, ref1, atol=tol, rtol=tol), f"head1 mismatch: {d1}"
    assert jnp.allclose(out2, ref2, atol=tol, rtol=tol), f"head2 mismatch: {d2}"


if __name__ == "__main__":
    key = jax.random.PRNGKey(0)
    k1, k2, k3 = jax.random.split(key, 3)

    # 1) Small aligned case: d = 3*16*16 = 768 (multiple of 128), n_rows = 16.
    _run_case(k1, B=2, T=8, C=3, H=16, W=16, mlp1_out=4, mlp2_out=3)

    # 2) Awkward case: d = 3*18*18 = 972 (not a multiple of the K tile ->
    #    padded weight table + in-kernel mask) and n_rows = 30 (ragged last
    #    row block, multi-step K reduction).
    _run_case(k2, B=3, T=10, C=3, H=18, W=18, mlp1_out=5, mlp2_out=2)

    # 3) bf16 frame path (halves the dominant HBM stream; f32 accumulation).
    _run_case(k3, B=2, T=8, C=3, H=16, W=16, mlp1_out=4, mlp2_out=3,
              frame_dtype=jnp.bfloat16)

    print("KERNEL_OK")
</pallas_src>

<mosaic_0001>
module attributes {stable_mosaic.version = 11 : i64} {
  func.func @kernel(%arg0: i32, %arg1: i32, %arg2: memref<1x1xf32, #tpu.memory_space<smem>>, %arg3: memref<1x1xf32, #tpu.memory_space<smem>>, %arg4: memref<8x768xf32, #tpu.memory_space<vmem>>, %arg5: memref<1x768xf32, #tpu.memory_space<vmem>>, %arg6: memref<8x768xf32, #tpu.memory_space<vmem>>, %arg7: memref<1x768xf32, #tpu.memory_space<vmem>>, %arg8: memref<8x1xf32, #tpu.memory_space<vmem>>, %arg9: memref<8x1xf32, #tpu.memory_space<vmem>>, %arg10: memref<8x128xf32, #tpu.memory_space<vmem>>, %arg11: memref<8x128xf32, #tpu.memory_space<vmem>>) attributes {dimension_semantics = [#tpu.dimension_semantics<parallel>, #tpu.dimension_semantics<arbitrary>], iteration_bounds = array<i64: 2, 1>, scalar_prefetch = 0 : i64, scratch_operands = 2 : i64, tpu.core_type = #tpu.core_type<tc>, window_params = [{transform_indices = @transform_0, window_bounds = array<i64: 1, 1>}, {transform_indices = @transform_1, window_bounds = array<i64: 1, 1>}, {transform_indices = @transform_2, window_bounds = array<i64: 8, 768>}, {pipeline_mode = #tpu.pipeline_mode<synchronous>, transform_indices = @transform_3, window_bounds = array<i64: 1, 768>}, {transform_indices = @transform_4, window_bounds = array<i64: 8, 768>}, {pipeline_mode = #tpu.pipeline_mode<synchronous>, transform_indices = @transform_5, window_bounds = array<i64: 1, 768>}, {transform_indices = @transform_6, window_bounds = array<i64: 8, 1>}, {transform_indices = @transform_7, window_bounds = array<i64: 8, 1>}]} {
    %c0_i32 = arith.constant 0 : i32
    %0 = arith.cmpi eq, %arg1, %c0_i32 : i32
    %1 = arith.extui %0 : i1 to i32
    %c0_i32_0 = arith.constant 0 : i32
    %2 = arith.cmpi ne, %1, %c0_i32_0 : i32
    scf.if %2 {
      %cst = arith.constant 0.000000e+00 : f32
      %44 = vector.broadcast %cst : f32 to vector<8x128xf32>
      %c0_16 = arith.constant 0 : index
      %c0_17 = arith.constant 0 : index
      %45 = vector.load %arg10[%c0_16, %c0_17] : memref<8x128xf32, #tpu.memory_space<vmem>>, vector<8x128xf32>
      tpu.vector_store %arg10[%c0_16, %c0_17], %44 {strides = array<i32>} : memref<8x128xf32, #tpu.memory_space<vmem>>, vector<8x128xf32>,
      %cst_18 = arith.constant 0.000000e+00 : f32
      %46 = vector.broadcast %cst_18 : f32 to vector<8x128xf32>
      %c0_19 = arith.constant 0 : index
      %c0_20 = arith.constant 0 : index
      %47 = vector.load %arg11[%c0_19, %c0_20] : memref<8x128xf32, #tpu.memory_space<vmem>>, vector<8x128xf32>
      tpu.vector_store %arg11[%c0_19, %c0_20], %46 {strides = array<i32>} : memref<8x128xf32, #tpu.memory_space<vmem>>, vector<8x128xf32>,
    } else {
    }
    %c0 = arith.constant 0 : index
    %c0_1 = arith.constant 0 : index
    %3 = vector.load %arg10[%c0, %c0_1] : memref<8x128xf32, #tpu.memory_space<vmem>>, vector<8x128xf32>
    %4 = arith.index_cast %arg1 : i32 to index
    %c0_2 = arith.constant 0 : index
    %5 = vector.load %arg5[%4, %c0_2] : memref<1x768xf32, #tpu.memory_space<vmem>>, vector<1x768xf32>
    %c0_3 = arith.constant 0 : index
    %c0_4 = arith.constant 0 : index
    %6 = vector.load %arg4[%c0_3, %c0_4] : memref<8x768xf32, #tpu.memory_space<vmem>>, vector<8x768xf32>
    %7 = vector.broadcast %5 : vector<1x768xf32> to vector<8x768xf32>
    %8 = arith.mulf %6, %7 : vector<8x768xf32>
    %9 = vector.extract_strided_slice %8 {offsets = [0, 0], sizes = [8, 128], strides = [1, 1]} : vector<8x768xf32> to vector<8x128xf32>
    %10 = vector.extract_strided_slice %8 {offsets = [0, 128], sizes = [8, 128], strides = [1, 1]} : vector<8x768xf32> to vector<8x128xf32>
    %11 = vector.extract_strided_slice %8 {offsets = [0, 256], sizes = [8, 128], strides = [1, 1]} : vector<8x768xf32> to vector<8x128xf32>
    %12 = vector.extract_strided_slice %8 {offsets = [0, 384], sizes = [8, 128], strides = [1, 1]} : vector<8x768xf32> to vector<8x128xf32>
    %13 = vector.extract_strided_slice %8 {offsets = [0, 512], sizes = [8, 128], strides = [1, 1]} : vector<8x768xf32> to vector<8x128xf32>
    %14 = vector.extract_strided_slice %8 {offsets = [0, 640], sizes = [8, 128], strides = [1, 1]} : vector<8x768xf32> to vector<8x128xf32>
    %15 = arith.addf %9, %10 : vector<8x128xf32>
    %16 = arith.addf %11, %12 : vector<8x128xf32>
    %17 = arith.addf %13, %14 : vector<8x128xf32>
    %18 = arith.addf %15, %16 : vector<8x128xf32>
    %19 = arith.addf %18, %17 : vector<8x128xf32>
    %20 = arith.addf %3, %19 : vector<8x128xf32>
    %c0_5 = arith.constant 0 : index
    %c0_6 = arith.constant 0 : index
    %21 = vector.load %arg10[%c0_5, %c0_6] : memref<8x128xf32, #tpu.memory_space<vmem>>, vector<8x128xf32>
    tpu.vector_store %arg10[%c0_5, %c0_6], %20 {strides = array<i32>} : memref<8x128xf32, #tpu.memory_space<vmem>>, vector<8x128xf32>,
    %c0_7 = arith.constant 0 : index
    %c0_8 = arith.constant 0 : index
    %22 = vector.load %arg11[%c0_7, %c0_8] : memref<8x128xf32, #tpu.memory_space<vmem>>, vector<8x128xf32>
    %23 = arith.index_cast %arg1 : i32 to index
    %c0_9 = arith.constant 0 : index
    %24 = vector.load %arg7[%23, %c0_9] : memref<1x768xf32, #tpu.memory_space<vmem>>, vector<1x768xf32>
    %c0_10 = arith.constant 0 : index
    %c0_11 = arith.constant 0 : index
    %25 = vector.load %arg6[%c0_10, %c0_11] : memref<8x768xf32, #tpu.memory_space<vmem>>, vector<8x768xf32>
    %26 = vector.broadcast %24 : vector<1x768xf32> to vector<8x768xf32>
    %27 = arith.mulf %25, %26 : vector<8x768xf32>
    %28 = vector.extract_strided_slice %27 {offsets = [0, 0], sizes = [8, 128], strides = [1, 1]} : vector<8x768xf32> to vector<8x128xf32>
    %29 = vector.extract_strided_slice %27 {offsets = [0, 128], sizes = [8, 128], strides = [1, 1]} : vector<8x768xf32> to vector<8x128xf32>
    %30 = vector.extract_strided_slice %27 {offsets = [0, 256], sizes = [8, 128], strides = [1, 1]} : vector<8x768xf32> to vector<8x128xf32>
    %31 = vector.extract_strided_slice %27 {offsets = [0, 384], sizes = [8, 128], strides = [1, 1]} : vector<8x768xf32> to vector<8x128xf32>
    %32 = vector.extract_strided_slice %27 {offsets = [0, 512], sizes = [8, 128], strides = [1, 1]} : vector<8x768xf32> to vector<8x128xf32>
    %33 = vector.extract_strided_slice %27 {offsets = [0, 640], sizes = [8, 128], strides = [1, 1]} : vector<8x768xf32> to vector<8x128xf32>
    %34 = arith.addf %28, %29 : vector<8x128xf32>
    %35 = arith.addf %30, %31 : vector<8x128xf32>
    %36 = arith.addf %32, %33 : vector<8x128xf32>
    %37 = arith.addf %34, %35 : vector<8x128xf32>
    %38 = arith.addf %37, %36 : vector<8x128xf32>
    %39 = arith.addf %22, %38 : vector<8x128xf32>
    %c0_12 = arith.constant 0 : index
    %c0_13 = arith.constant 0 : index
    %40 = vector.load %arg11[%c0_12, %c0_13] : memref<8x128xf32, #tpu.memory_space<vmem>>, vector<8x128xf32>
    tpu.vector_store %arg11[%c0_12, %c0_13], %39 {strides = array<i32>} : memref<8x128xf32, #tpu.memory_space<vmem>>, vector<8x128xf32>,
    %c0_i32_14 = arith.constant 0 : i32
    %41 = arith.cmpi eq, %arg1, %c0_i32_14 : i32
    %42 = arith.extui %41 : i1 to i32
    %c0_i32_15 = arith.constant 0 : i32
    %43 = arith.cmpi ne, %42, %c0_i32_15 : i32
    scf.if %43 {
      %c0_16 = arith.constant 0 : index
      %c0_17 = arith.constant 0 : index
      %44 = vector.load %arg10[%c0_16, %c0_17] : memref<8x128xf32, #tpu.memory_space<vmem>>, vector<8x128xf32>
      %cst = arith.constant dense<0.000000e+00> : vector<8xf32>
      %45 = vector.multi_reduction <add>, %44, %cst [1] : vector<8x128xf32> to vector<8xf32>
      %46 = vector.shape_cast %45 : vector<8xf32> to vector<8x1xf32>
      %c0_18 = arith.constant 0 : index
      %c0_19 = arith.constant 0 : index
      %47 = vector.load %arg11[%c0_18, %c0_19] : memref<8x128xf32, #tpu.memory_space<vmem>>, vector<8x128xf32>
      %cst_20 = arith.constant dense<0.000000e+00> : vector<8xf32>
      %48 = vector.multi_reduction <add>, %47, %cst_20 [1] : vector<8x128xf32> to vector<8xf32>
      %49 = vector.shape_cast %48 : vector<8xf32> to vector<8x1xf32>
      %c0_21 = arith.constant 0 : index
      %c0_22 = arith.constant 0 : index
      %50 = memref.load %arg2[%c0_21, %c0_22] : memref<1x1xf32, #tpu.memory_space<smem>>
      %51 = vector.broadcast %50 : f32 to vector<8x1xf32>
      %52 = arith.addf %46, %51 : vector<8x1xf32>
      %c0_23 = arith.constant 0 : index
      %c0_24 = arith.constant 0 : index
      %53 = vector.load %arg8[%c0_23, %c0_24] : memref<8x1xf32, #tpu.memory_space<vmem>>, vector<8x1xf32>
      tpu.vector_store %arg8[%c0_23, %c0_24], %52 {strides = array<i32>} : memref<8x1xf32, #tpu.memory_space<vmem>>, vector<8x1xf32>,
      %c0_25 = arith.constant 0 : index
      %c0_26 = arith.constant 0 : index
      %54 = memref.load %arg3[%c0_25, %c0_26] : memref<1x1xf32, #tpu.memory_space<smem>>
      %55 = vector.broadcast %54 : f32 to vector<8x1xf32>
      %56 = arith.addf %49, %55 : vector<8x1xf32>
      %c0_27 = arith.constant 0 : index
      %c0_28 = arith.constant 0 : index
      %57 = vector.load %arg9[%c0_27, %c0_28] : memref<8x1xf32, #tpu.memory_space<vmem>>, vector<8x1xf32>
      tpu.vector_store %arg9[%c0_27, %c0_28], %56 {strides = array<i32>} : memref<8x1xf32, #tpu.memory_space<vmem>>, vector<8x1xf32>,
    } else {
    }
    return
  }
  func.func @transform_0(%arg0: i32, %arg1: i32) -> (i32, i32) {
    %c0_i32 = arith.constant 0 : i32
    %c0_i32_0 = arith.constant 0 : i32
    %c0_i32_1 = arith.constant 0 : i32
    return %c0_i32, %c0_i32_0 : i32, i32
  }
  func.func @transform_1(%arg0: i32, %arg1: i32) -> (i32, i32) {
    %c0_i32 = arith.constant 0 : i32
    %c0_i32_0 = arith.constant 0 : i32
    %c0_i32_1 = arith.constant 0 : i32
    return %c0_i32, %c0_i32_0 : i32, i32
  }
  func.func @transform_2(%arg0: i32, %arg1: i32) -> (i32, i32) {
    %c0_i32 = arith.constant 0 : i32
    return %arg0, %arg1 : i32, i32
  }
  func.func @transform_3(%arg0: i32, %arg1: i32) -> (i32, i32) {
    %c0_i32 = arith.constant 0 : i32
    %c0_i32_0 = arith.constant 0 : i32
    %c0_i32_1 = arith.constant 0 : i32
    return %c0_i32, %c0_i32_0 : i32, i32
  }
  func.func @transform_4(%arg0: i32, %arg1: i32) -> (i32, i32) {
    %c0_i32 = arith.constant 0 : i32
    return %arg0, %arg1 : i32, i32
  }
  func.func @transform_5(%arg0: i32, %arg1: i32) -> (i32, i32) {
    %c0_i32 = arith.constant 0 : i32
    %c0_i32_0 = arith.constant 0 : i32
    %c0_i32_1 = arith.constant 0 : i32
    return %c0_i32, %c0_i32_0 : i32, i32
  }
  func.func @transform_6(%arg0: i32, %arg1: i32) -> (i32, i32) {
    %c0_i32 = arith.constant 0 : i32
    %c0_i32_0 = arith.constant 0 : i32
    return %arg0, %c0_i32 : i32, i32
  }
  func.func @transform_7(%arg0: i32, %arg1: i32) -> (i32, i32) {
    %c0_i32 = arith.constant 0 : i32
    %c0_i32_0 = arith.constant 0 : i32
    return %arg0, %c0_i32 : i32, i32
  }
}

module attributes {stable_mosaic.version = 11 : i64} {
  func.func @_mlp_heads_kernel(%arg0: memref<2x8xf32, #tpu.memory_space<vmem>>, %arg1: memref<2x8xf32, #tpu.memory_space<vmem>>, %arg2: memref<8x1024xf32, #tpu.memory_space<vmem>>, %arg3: memref<8x1024xf32, #tpu.memory_space<vmem>>, %arg4: memref<1x1024xf32, #tpu.memory_space<vmem>>, %arg5: memref<512x4xf32, #tpu.memory_space<vmem>>, %arg6: memref<1x4xf32, #tpu.memory_space<vmem>>, %arg7: memref<512x3xf32, #tpu.memory_space<vmem>>, %arg8: memref<1x3xf32, #tpu.memory_space<vmem>>, %arg9: memref<2x4xf32, #tpu.memory_space<vmem>>, %arg10: memref<2x3xf32, #tpu.memory_space<vmem>>) attributes {dimension_semantics = [], scalar_prefetch = 0 : i64, scratch_operands = 0 : i64, tpu.core_type = #tpu.core_type<tc>} {
    %c0 = arith.constant 0 : index
    %c0_0 = arith.constant 0 : index
    %0 = vector.load %arg0[%c0, %c0_0] : memref<2x8xf32, #tpu.memory_space<vmem>>, vector<2x8xf32>
    %c0_1 = arith.constant 0 : index
    %c0_2 = arith.constant 0 : index
    %1 = vector.load %arg2[%c0_1, %c0_2] : memref<8x1024xf32, #tpu.memory_space<vmem>>, vector<8x1024xf32>
    %cst = arith.constant dense<0.000000e+00> : vector<2x1024xf32>
    %2 = tpu.matmul %0, %1, %cst {dimension_numbers = #tpu.dot_dimension_numbers<[1], [0], [0], [1], [0, 0, 1, 1], [], []>} : vector<2x8xf32>, vector<8x1024xf32>, vector<2x1024xf32> -> vector<2x1024xf32>
    %c0_3 = arith.constant 0 : index
    %c0_4 = arith.constant 0 : index
    %3 = vector.load %arg1[%c0_3, %c0_4] : memref<2x8xf32, #tpu.memory_space<vmem>>, vector<2x8xf32>
    %c0_5 = arith.constant 0 : index
    %c0_6 = arith.constant 0 : index
    %4 = vector.load %arg3[%c0_5, %c0_6] : memref<8x1024xf32, #tpu.memory_space<vmem>>, vector<8x1024xf32>
    %cst_7 = arith.constant dense<0.000000e+00> : vector<2x1024xf32>
    %5 = tpu.matmul %3, %4, %cst_7 {dimension_numbers = #tpu.dot_dimension_numbers<[1], [0], [0], [1], [0, 0, 1, 1], [], []>} : vector<2x8xf32>, vector<8x1024xf32>, vector<2x1024xf32> -> vector<2x1024xf32>
    %6 = arith.addf %2, %5 : vector<2x1024xf32>
    %c0_8 = arith.constant 0 : index
    %c0_9 = arith.constant 0 : index
    %7 = vector.load %arg4[%c0_8, %c0_9] : memref<1x1024xf32, #tpu.memory_space<vmem>>, vector<1x1024xf32>
    %8 = vector.broadcast %7 : vector<1x1024xf32> to vector<2x1024xf32>
    %9 = arith.addf %6, %8 : vector<2x1024xf32>
    %cst_10 = arith.constant 0.000000e+00 : f32
    %10 = vector.broadcast %cst_10 : f32 to vector<2x1024xf32>
    %11 = arith.maximumf %9, %10 : vector<2x1024xf32>
    %12 = vector.extract_strided_slice %11 {offsets = [0, 0], sizes = [2, 512], strides = [1, 1]} : vector<2x1024xf32> to vector<2x512xf32>
    %c0_11 = arith.constant 0 : index
    %c0_12 = arith.constant 0 : index
    %13 = vector.load %arg5[%c0_11, %c0_12] : memref<512x4xf32, #tpu.memory_space<vmem>>, vector<512x4xf32>
    %cst_13 = arith.constant dense<0.000000e+00> : vector<2x4xf32>
    %14 = tpu.matmul %12, %13, %cst_13 {dimension_numbers = #tpu.dot_dimension_numbers<[1], [0], [0], [1], [0, 0, 1, 1], [], []>} : vector<2x512xf32>, vector<512x4xf32>, vector<2x4xf32> -> vector<2x4xf32>
    %c0_14 = arith.constant 0 : index
    %c0_15 = arith.constant 0 : index
    %15 = vector.load %arg6[%c0_14, %c0_15] : memref<1x4xf32, #tpu.memory_space<vmem>>, vector<1x4xf32>
    %16 = vector.broadcast %15 : vector<1x4xf32> to vector<2x4xf32>
    %17 = arith.addf %14, %16 : vector<2x4xf32>
    %c0_16 = arith.constant 0 : index
    %c0_17 = arith.constant 0 : index
    %18 = vector.load %arg9[%c0_16, %c0_17] : memref<2x4xf32, #tpu.memory_space<vmem>>, vector<2x4xf32>
    tpu.vector_store %arg9[%c0_16, %c0_17], %17 {strides = array<i32>} : memref<2x4xf32, #tpu.memory_space<vmem>>, vector<2x4xf32>,
    %19 = vector.extract_strided_slice %11 {offsets = [0, 512], sizes = [2, 512], strides = [1, 1]} : vector<2x1024xf32> to vector<2x512xf32>
    %c0_18 = arith.constant 0 : index
    %c0_19 = arith.constant 0 : index
    %20 = vector.load %arg7[%c0_18, %c0_19] : memref<512x3xf32, #tpu.memory_space<vmem>>, vector<512x3xf32>
    %cst_20 = arith.constant dense<0.000000e+00> : vector<2x3xf32>
    %21 = tpu.matmul %19, %20, %cst_20 {dimension_numbers = #tpu.dot_dimension_numbers<[1], [0], [0], [1], [0, 0, 1, 1], [], []>} : vector<2x512xf32>, vector<512x3xf32>, vector<2x3xf32> -> vector<2x3xf32>
    %c0_21 = arith.constant 0 : index
    %c0_22 = arith.constant 0 : index
    %22 = vector.load %arg8[%c0_21, %c0_22] : memref<1x3xf32, #tpu.memory_space<vmem>>, vector<1x3xf32>
    %23 = vector.broadcast %22 : vector<1x3xf32> to vector<2x3xf32>
    %24 = arith.addf %21, %23 : vector<2x3xf32>
    %c0_23 = arith.constant 0 : index
    %c0_24 = arith.constant 0 : index
    %25 = vector.load %arg10[%c0_23, %c0_24] : memref<2x3xf32, #tpu.memory_space<vmem>>, vector<2x3xf32>
    tpu.vector_store %arg10[%c0_23, %c0_24], %24 {strides = array<i32>} : memref<2x3xf32, #tpu.memory_space<vmem>>, vector<2x3xf32>,
    return
  }
}

</mosaic_0001>

<llo_original>
// kernel: multi_physnet_forward.2
$region0: #{multi_physnet_forward.2}
  #allocation0 [shape = 'u32[]', space=smem, size = 0x4, offset = 0x4, fixed_abs, tag = 'smem constant byte address 0x4 - core index']
  #allocation1 [shape = 'u32[72,128]{1,0:T(1,128)}', space=vmem, size = 0x9000, scoped, tag = 'internal scratch']
  #allocation2 [shape = 'f32[8,128]{1,0:T(8,128)}', space=vmem, size = 0x1000, scoped, tag = 'scratch operand']
  #allocation3 [shape = 'f32[8,128]{1,0:T(8,128)}', space=vmem, size = 0x1000, scoped, tag = 'scratch operand']
  #allocation4 [shape = 'f32[1,1]{1,0:T(1,128)S(6)}', space=smem, size = 0x200, scoped, tag = 'scoped memory for multi_physnet_forward.2']
  #allocation5 [shape = 'f32[1,1]{1,0:T(1,128)S(6)}', space=smem, size = 0x200, scoped, tag = 'scoped memory for multi_physnet_forward.2']
  %s0 = inlined_call_operand.<no memory space> [shape: f32[1,1], index: 0, kind: input, shape index: {}]
  %s1 = inlined_call_operand.<no memory space> [shape: f32[1,1], index: 1, kind: input, shape index: {}]
  %s2 = inlined_call_operand.vmem [shape: f32[16,768], index: 2, kind: input, shape index: {}]
  %s3 = inlined_call_operand.vmem [shape: f32[1,768], index: 3, kind: input, shape index: {}]
  %s4 = inlined_call_operand.vmem [shape: f32[16,768], index: 4, kind: input, shape index: {}]
  %s5 = inlined_call_operand.vmem [shape: f32[1,768], index: 5, kind: input, shape index: {}]
  %s6 = inlined_call_operand.vmem [shape: f32[16,1], index: 6, kind: output, shape index: {0}]
  %s7 = inlined_call_operand.vmem [shape: f32[16,1], index: 7, kind: output, shape index: {1}]
  %8 = xla_tuple %s6, %s7
  %s9 = sld [smem:[#allocation0]]
  $region73: #{multi_physnet_forward.2} parent=0
    _
  %s11 = ssub.s32 1, %s9
  %s12 = scalar_select 0, %s11, %s9
  %13 = sst [smem:[#allocation4]] %s0
  %14 = sst [smem:[#allocation5]] %s1
  loop: start=0, step=1, limit=4
  $region2: #{multi_physnet_forward.2} parent=0 // loop_pre_header
    _
  $region3: #{multi_physnet_forward.2} parent=0 // loop_header
    %s16 = sphi 0, %s20
    %p17 = scmp.ge.s32.totalorder %s16, 4
    %s23 = sphi 0, %s35
    %s24 = sphi 0, %s31
    %s25 = sphi 0, %s23
    %s26 = sphi 0, %s24
    %s27 = sphi 0, %s25
    %s28 = sphi 0, %s26
    %s36 = sphi 0, %s36
    %s38 = sphi 0, %s36
    %s39 = sphi 0, %s38
    %s53 = sphi 0, %s39
    %s57 = sphi 0, %s57
    %s59 = sphi 0, %s57
    %s60 = sphi 0, %s59
    %s74 = sphi 0, %s60
    %s82 = sphi 0, %s84
    %s85 = sphi 0, %s82
    %s86 = sphi 0, %s85
    %s102 = sphi 0, %s86
    %s106 = sphi 0, %s106
    %s108 = sphi 0, %s106
    %s109 = sphi 0, %s108
    %s123 = sphi 0, %s109
    %s131 = sphi 0, %s133
    %s134 = sphi 0, %s131
    %s135 = sphi 0, %s134
    %s151 = sphi 0, %s135
    %s155 = sphi 0, %s155
    %s157 = sphi 0, %s155
    %s158 = sphi 0, %s157
    %s172 = sphi 0, %s158
    %s178 = sphi 0, %s180
    %s181 = sphi 0, %s178
    %s182 = sphi 0, %s181
    %s198 = sphi 0, %s182
    %s204 = sphi 0, %s206
    %s207 = sphi 0, %s204
    %s208 = sphi 0, %s207
    %s224 = sphi 0, %s208
  $region4: #{multi_physnet_forward.2} parent=0 // loop_header_branch
    %19 = sbr.rel (%p17) target = $region8
  $region5: #{multi_physnet_forward.2} parent=0 // loop_body
    %s21 = ssub.s32 %s16, 1
    %s22 = ssub.s32 %s16, 2
    %s29 = sadd.s32 1, %s24
    %p30 = scmp.ge.s32.totalorder %s29, 1
    %s31 = scalar_select %p30, 0, %s29
    %s32 = sadd.s32 1, %s23
    %s33 = scalar_select %p30, %s32, %s23
    %p34 = scmp.ge.s32.totalorder %s33, 2
    %s35 = scalar_select %p34, 0, %s33
    %s37 = sadd.s32 %s36, 1
    %p40 = scmp.eq.s32.totalorder %s16, 1
    %p41 = scmp.ne.s32.totalorder %s36, %s38
    %p42 = scmp.eq.s32.totalorder %s16, 0
    %p43 = por %p41, %p42
    %p44 = scmp.ne.s32.totalorder %s36, %s38
    %p45 = scmp.eq.s32.totalorder %s21, 1
    %p46 = por %p44, %p45
    %p47 = scmp.ne.s32.totalorder %s38, %s39
    %p48 = scmp.eq.s32.totalorder %s21, 0
    %p49 = por %p47, %p48
    %p50 = scmp.ne.s32.totalorder %s38, %s39
    %p51 = scmp.eq.s32.totalorder %s22, 1
    %p52 = por %p50, %p51
    %p54 = scmp.ne.s32.totalorder %s39, %s53
    %p55 = scmp.eq.s32.totalorder %s22, 0
    %p56 = por %p54, %p55
    %s58 = sadd.s32 %s57, 1
    %p61 = scmp.eq.s32.totalorder %s16, 1
    %p62 = scmp.ne.s32.totalorder %s57, %s59
    %p63 = scmp.eq.s32.totalorder %s16, 0
    %p64 = por %p62, %p63
    %p65 = scmp.ne.s32.totalorder %s57, %s59
    %p66 = scmp.eq.s32.totalorder %s21, 1
    %p67 = por %p65, %p66
    %p68 = scmp.ne.s32.totalorder %s59, %s60
    %p69 = scmp.eq.s32.totalorder %s21, 0
    %p70 = por %p68, %p69
    %p71 = scmp.ne.s32.totalorder %s59, %s60
    %p72 = scmp.eq.s32.totalorder %s22, 1
    %p73 = por %p71, %p72
    %p75 = scmp.ne.s32.totalorder %s60, %s74
    %p76 = scmp.eq.s32.totalorder %s22, 0
    %p77 = por %p75, %p76
    %s78 = ssub.s32 %s23, %s35
    %s79 = ssub.s32 %s24, %s31
    %s80 = sor.u32 %s78, %s79
    %p81 = scmp.eq.s32.totalorder %s80, 0
    %s83 = sadd.s32 %s82, 1
    %s84 = scalar_select %p81, %s82, %s83
    %p87 = pneg %p81
    %p88 = scmp.eq.s32.totalorder %s16, 1
    %p89 = por %p87, %p88
    %p90 = scmp.ne.s32.totalorder %s82, %s85
    %p91 = scmp.eq.s32.totalorder %s16, 0
    %p92 = por %p90, %p91
    %p93 = scmp.ne.s32.totalorder %s82, %s85
    %p94 = scmp.eq.s32.totalorder %s21, 1
    %p95 = por %p93, %p94
    %p96 = scmp.ne.s32.totalorder %s85, %s86
    %p97 = scmp.eq.s32.totalorder %s21, 0
    %p98 = por %p96, %p97
    %p99 = scmp.ne.s32.totalorder %s85, %s86
    %p100 = scmp.eq.s32.totalorder %s22, 1
    %p101 = por %p99, %p100
    %p103 = scmp.ne.s32.totalorder %s86, %s102
    %p104 = scmp.eq.s32.totalorder %s22, 0
    %p105 = por %p103, %p104
    %s107 = sadd.s32 %s106, 1
    %p110 = scmp.eq.s32.totalorder %s16, 1
    %p111 = scmp.ne.s32.totalorder %s106, %s108
    %p112 = scmp.eq.s32.totalorder %s16, 0
    %p113 = por %p111, %p112
    %p114 = scmp.ne.s32.totalorder %s106, %s108
    %p115 = scmp.eq.s32.totalorder %s21, 1
    %p116 = por %p114, %p115
    %p117 = scmp.ne.s32.totalorder %s108, %s109
    %p118 = scmp.eq.s32.totalorder %s21, 0
    %p119 = por %p117, %p118
    %p120 = scmp.ne.s32.totalorder %s108, %s109
    %p121 = scmp.eq.s32.totalorder %s22, 1
    %p122 = por %p120, %p121
    %p124 = scmp.ne.s32.totalorder %s109, %s123
    %p125 = scmp.eq.s32.totalorder %s22, 0
    %p126 = por %p124, %p125
    %s127 = ssub.s32 %s23, %s35
    %s128 = ssub.s32 %s24, %s31
    %s129 = sor.u32 %s127, %s128
    %p130 = scmp.eq.s32.totalorder %s129, 0
    %s132 = sadd.s32 %s131, 1
    %s133 = scalar_select %p130, %s131, %s132
    %p136 = pneg %p130
    %p137 = scmp.eq.s32.totalorder %s16, 1
    %p138 = por %p136, %p137
    %p139 = scmp.ne.s32.totalorder %s131, %s134
    %p140 = scmp.eq.s32.totalorder %s16, 0
    %p141 = por %p139, %p140
    %p142 = scmp.ne.s32.totalorder %s131, %s134
    %p143 = scmp.eq.s32.totalorder %s21, 1
    %p144 = por %p142, %p143
    %p145 = scmp.ne.s32.totalorder %s134, %s135
    %p146 = scmp.eq.s32.totalorder %s21, 0
    %p147 = por %p145, %p146
    %p148 = scmp.ne.s32.totalorder %s134, %s135
    %p149 = scmp.eq.s32.totalorder %s22, 1
    %p150 = por %p148, %p149
    %p152 = scmp.ne.s32.totalorder %s135, %s151
    %p153 = scmp.eq.s32.totalorder %s22, 0
    %p154 = por %p152, %p153
    %s156 = sadd.s32 %s155, 1
    %p159 = scmp.eq.s32.totalorder %s16, 1
    %p160 = scmp.ne.s32.totalorder %s155, %s157
    %p161 = scmp.eq.s32.totalorder %s16, 0
    %p162 = por %p160, %p161
    %p163 = scmp.ne.s32.totalorder %s155, %s157
    %p164 = scmp.eq.s32.totalorder %s21, 1
    %p165 = por %p163, %p164
    %p166 = scmp.ne.s32.totalorder %s157, %s158
    %p167 = scmp.eq.s32.totalorder %s21, 0
    %p168 = por %p166, %p167
    %p169 = scmp.ne.s32.totalorder %s157, %s158
    %p170 = scmp.eq.s32.totalorder %s22, 1
    %p171 = por %p169, %p170
    %p173 = scmp.ne.s32.totalorder %s158, %s172
    %p174 = scmp.eq.s32.totalorder %s22, 0
    %p175 = por %p173, %p174
    %s176 = ssub.s32 %s23, %s35
    %p177 = scmp.eq.s32.totalorder %s176, 0
    %s179 = sadd.s32 %s178, 1
    %s180 = scalar_select %p177, %s178, %s179
    %p183 = pneg %p177
    %p184 = scmp.eq.s32.totalorder %s16, 1
    %p185 = por %p183, %p184
    %p186 = scmp.ne.s32.totalorder %s178, %s181
    %p187 = scmp.eq.s32.totalorder %s16, 0
    %p188 = por %p186, %p187
    %p189 = scmp.ne.s32.totalorder %s178, %s181
    %p190 = scmp.eq.s32.totalorder %s21, 1
    %p191 = por %p189, %p190
    %p192 = scmp.ne.s32.totalorder %s181, %s182
    %p193 = scmp.eq.s32.totalorder %s21, 0
    %p194 = por %p192, %p193
    %p195 = scmp.ne.s32.totalorder %s181, %s182
    %p196 = scmp.eq.s32.totalorder %s22, 1
    %p197 = por %p195, %p196
    %p199 = scmp.ne.s32.totalorder %s182, %s198
    %p200 = scmp.eq.s32.totalorder %s22, 0
    %p201 = por %p199, %p200
    %s202 = ssub.s32 %s23, %s35
    %p203 = scmp.eq.s32.totalorder %s202, 0
    %s205 = sadd.s32 %s204, 1
    %s206 = scalar_select %p203, %s204, %s205
    %p209 = pneg %p203
    %p210 = scmp.eq.s32.totalorder %s16, 1
    %p211 = por %p209, %p210
    %p212 = scmp.ne.s32.totalorder %s204, %s207
    %p213 = scmp.eq.s32.totalorder %s16, 0
    %p214 = por %p212, %p213
    %p215 = scmp.ne.s32.totalorder %s204, %s207
    %p216 = scmp.eq.s32.totalorder %s21, 1
    %p217 = por %p215, %p216
    %p218 = scmp.ne.s32.totalorder %s207, %s208
    %p219 = scmp.eq.s32.totalorder %s21, 0
    %p220 = por %p218, %p219
    %p221 = scmp.ne.s32.totalorder %s207, %s208
    %p222 = scmp.eq.s32.totalorder %s22, 1
    %p223 = por %p221, %p222
    %p225 = scmp.ne.s32.totalorder %s208, %s224
    %p226 = scmp.eq.s32.totalorder %s22, 0
    %p227 = por %p225, %p226
    %p228 = scmp.le.s32.totalorder 1, %s16
    %p229 = scmp.lt.s32.totalorder %s16, 3
    %p230 = pnand %p228, %p229
    %p231 = pneg %p230
    // Predicated region
    $region9: #{multi_physnet_forward.2} parent=5 // pred_check
      _
    $region10: #{multi_physnet_forward.2} parent=5 // pred_check_branch
      %233 = sbr.rel (%p230) target = $region12
    $region11: #{multi_physnet_forward.2} parent=5 // pred_region
      %s234 = ssub.s32 %s16, 1
      // Predicated region
      $region13: #{multi_physnet_forward.2} parent=11 // pred_check
        %p235 = pneg %p49
      $region14: #{multi_physnet_forward.2} parent=11 // pred_check_branch
        %237 = sbr.rel (%p235) target = $region16
      $region15: #{multi_physnet_forward.2} parent=11 // pred_region
        _
      $region16: #{multi_physnet_forward.2} parent=11 // pred_fallthru
        _
      // Predicated region
      $region17: #{multi_physnet_forward.2} parent=11 // pred_check
        %p238 = pneg %p70
      $region18: #{multi_physnet_forward.2} parent=11 // pred_check_branch
        %240 = sbr.rel (%p238) target = $region20
      $region19: #{multi_physnet_forward.2} parent=11 // pred_region
        _
      $region20: #{multi_physnet_forward.2} parent=11 // pred_fallthru
        _
      // Predicated region
      $region21: #{multi_physnet_forward.2} parent=11 // pred_check
        %p241 = pneg %p119
      $region22: #{multi_physnet_forward.2} parent=11 // pred_check_branch
        %243 = sbr.rel (%p241) target = $region24
      $region23: #{multi_physnet_forward.2} parent=11 // pred_region
        _
      $region24: #{multi_physnet_forward.2} parent=11 // pred_fallthru
        _
      // Predicated region
      $region25: #{multi_physnet_forward.2} parent=11 // pred_check
        %p244 = pneg %p168
      $region26: #{multi_physnet_forward.2} parent=11 // pred_check_branch
        %246 = sbr.rel (%p244) target = $region28
      $region27: #{multi_physnet_forward.2} parent=11 // pred_region
        _
      $region28: #{multi_physnet_forward.2} parent=11 // pred_fallthru
        _
    $region12: #{multi_physnet_forward.2} parent=5 // pred_fallthru
      _
    %p247 = scmp.lt.s32.totalorder %s16, 2
    // Predicated region
    $region29: #{multi_physnet_forward.2} parent=5 // pred_check
      %p248 = pneg %p247
    $region30: #{multi_physnet_forward.2} parent=5 // pred_check_branch
      %250 = sbr.rel (%p248) target = $region32
    $region31: #{multi_physnet_forward.2} parent=5 // pred_region
      // Predicated region
      $region33: #{multi_physnet_forward.2} parent=31 // pred_check
        %p251 = pneg %p92
      $region34: #{multi_physnet_forward.2} parent=31 // pred_check_branch
        %253 = sbr.rel (%p251) target = $region36
      $region35: #{multi_physnet_forward.2} parent=31 // pred_region
        %s254 = smul.u32 6, %s24
        %p255 = scmp.lt.s32.totalorder %s23, 1
        %s256 = scalar_select %p255, %s23, 1
        %p257 = scmp.lt.s32.totalorder %s254, 5
        %s258 = scalar_select %p257, %s254, 5
        %s259 = smul.addr %s256, 6
        %s260 = sadd.s32 %s258, %s259
        %s261 = smul.addr %s260, 8
        %s262 = scalar_lea.vmem %s2, %s261
        %s263 = smul.u32 6, %s24
      $region36: #{multi_physnet_forward.2} parent=31 // pred_fallthru
        _
      // Predicated region
      $region37: #{multi_physnet_forward.2} parent=31 // pred_check
        %p264 = pneg %p141
      $region38: #{multi_physnet_forward.2} parent=31 // pred_check_branch
        %266 = sbr.rel (%p264) target = $region40
      $region39: #{multi_physnet_forward.2} parent=31 // pred_region
        %s267 = smul.u32 6, %s24
        %p268 = scmp.lt.s32.totalorder %s23, 1
        %s269 = scalar_select %p268, %s23, 1
        %p270 = scmp.lt.s32.totalorder %s267, 5
        %s271 = scalar_select %p270, %s267, 5
        %s272 = smul.addr %s269, 6
        %s273 = sadd.s32 %s271, %s272
        %s274 = smul.addr %s273, 8
        %s275 = scalar_lea.vmem %s4, %s274
        %s276 = smul.u32 6, %s24
      $region40: #{multi_physnet_forward.2} parent=31 // pred_fallthru
        _
    $region32: #{multi_physnet_forward.2} parent=5 // pred_fallthru
      _
    %p277 = scmp.le.s32.totalorder 1, %s16
    %p278 = scmp.lt.s32.totalorder %s16, 3
    %p279 = pnand %p277, %p278
    %p280 = pneg %p279
    // Predicated region
    $region41: #{multi_physnet_forward.2} parent=5 // pred_check
      _
    $region42: #{multi_physnet_forward.2} parent=5 // pred_check_branch
      %282 = sbr.rel (%p279) target = $region44
    $region43: #{multi_physnet_forward.2} parent=5 // pred_region
      %s283 = ssub.s32 %s16, 1
      %p284 = pneg %p49
      %p285 = pneg %p46
      %p286 = pneg %p70
      %p287 = pneg %p67
      %s288 = smul.u32 6, %s26
      %p289 = scmp.lt.s32.totalorder %s25, 1
      %s290 = scalar_select %p289, %s25, 1
      %p291 = scmp.lt.s32.totalorder %s288, 5
      %s292 = scalar_select %p291, %s288, 5
      %s293 = smul.addr %s290, 6
      %s294 = sadd.s32 %s292, %s293
      %s295 = smul.addr %s294, 8
      %s296 = scalar_lea.vmem %s2, %s295
      %p297 = pneg %p98
      %p298 = pneg %p95
      %p299 = pneg %p119
      %p300 = pneg %p116
      %s301 = smul.u32 6, %s26
      %p302 = scmp.lt.s32.totalorder %s25, 1
      %s303 = scalar_select %p302, %s25, 1
      %p304 = scmp.lt.s32.totalorder %s301, 5
      %s305 = scalar_select %p304, %s301, 5
      %s306 = smul.addr %s303, 6
      %s307 = sadd.s32 %s305, %s306
      %s308 = smul.addr %s307, 8
      %s309 = scalar_lea.vmem %s4, %s308
      %p310 = pneg %p147
      %p311 = pneg %p144
      %p312 = pneg %p168
      %p313 = pneg %p165
      %p314 = pneg %p194
      %p315 = pneg %p191
      %p316 = scmp.lt.s32.totalorder %s25, 1
      %s317 = scalar_select %p316, %s25, 1
      %s318 = smul.addr %s317, 8
      %s319 = scalar_lea.vmem %s6, %s318
      %p320 = pneg %p220
      %p321 = pneg %p217
      %p322 = scmp.lt.s32.totalorder %s25, 1
      %s323 = scalar_select %p322, %s25, 1
      %s324 = smul.addr %s323, 8
      %s325 = scalar_lea.vmem %s7, %s324
      %s326 = smul.u32 6, %s26
      %p327 = scmp.lt.s32.totalorder %s25, 1
      %s328 = scalar_select %p327, %s25, 1
      %p329 = scmp.lt.s32.totalorder %s326, 5
      %s330 = scalar_select %p329, %s326, 5
      %s331 = smul.addr %s328, 6
      %s332 = sadd.s32 %s330, %s331
      %s333 = smul.addr %s332, 8
      %s334 = scalar_lea.vmem %s2, %s333
      %s335 = smul.u32 6, %s26
      %s336 = smul.u32 6, %s26
      %p337 = scmp.lt.s32.totalorder %s25, 1
      %s338 = scalar_select %p337, %s25, 1
      %p339 = scmp.lt.s32.totalorder %s336, 5
      %s340 = scalar_select %p339, %s336, 5
      %s341 = smul.addr %s338, 6
      %s342 = sadd.s32 %s340, %s341
      %s343 = smul.addr %s342, 8
      %s344 = scalar_lea.vmem %s4, %s343
      %s345 = smul.u32 6, %s26
      %p346 = scmp.lt.s32.totalorder %s25, 1
      %s347 = scalar_select %p346, %s25, 1
      %s348 = smul.addr %s347, 8
      %s349 = scalar_lea.vmem %s6, %s348
      %p350 = scmp.lt.s32.totalorder %s25, 1
      %s351 = scalar_select %p350, %s25, 1
      %s352 = smul.addr %s351, 8
      %s353 = scalar_lea.vmem %s7, %s352
      %p354 = scmp.eq.s32.totalorder %s26, 0
      // Predicated region
      $region45: #{multi_physnet_forward.2} parent=43 // pred_check
        %p355 = pneg %p354
      $region46: #{multi_physnet_forward.2} parent=43 // pred_check_branch
        %357 = sbr.rel (%p355) target = $region48
      $region47: #{multi_physnet_forward.2} parent=43 // pred_region
        %358 = vst [vmem:[#allocation2] sm:$0xff] 0.0
        %359 = vst [vmem:[#allocation3] sm:$0xff] 0.0
      $region48: #{multi_physnet_forward.2} parent=43 // pred_fallthru
        _
      %v360 = vld [vmem:[#allocation2] sm:$0xff]
      %s361 = smul.u32 %s26, 6
      %s362 = scalar_lea.vmem %s3, %s361
      %v363 = vld [vmem:[%s362] sm:$0x3f]
      %v364 = vld [vmem:[%s334] sm:$0xff]
      %v365 = vld [vmem:[%s334 + $0x8] sm:$0xff]
      %v366 = vld [vmem:[%s334 + $0x10] sm:$0xff]
      %v367 = vld [vmem:[%s334 + $0x18] sm:$0xff]
      %v368 = vld [vmem:[%s334 + $0x20] sm:$0xff]
      %v369 = vld [vmem:[%s334 + $0x28] sm:$0xff]
      %v371 = vperm.slane %v363, 0
      %v372 = vperm.slane %v363, 1
      %v373 = vperm.slane %v363, 2
      %v374 = vperm.slane %v363, 3
      %v375 = vperm.slane %v363, 4
      %v376 = vperm.slane %v363, 5
      %v383 = vmul.f32 %v364, %v371
      %v384 = vmul.f32 %v365, %v372
      %v385 = vmul.f32 %v366, %v373
      %v386 = vmul.f32 %v367, %v374
      %v387 = vmul.f32 %v368, %v375
      %v388 = vmul.f32 %v369, %v376
      %v389 = vadd.f32 %v383, %v384
      %v390 = vadd.f32 %v385, %v386
      %v391 = vadd.f32 %v387, %v388
      %v392 = vadd.f32 %v389, %v390
      %v393 = vadd.f32 %v392, %v391
      %v394 = vadd.f32 %v360, %v393
      %395 = vst [vmem:[#allocation2] sm:$0xff] %v394
      %v396 = vld [vmem:[#allocation3] sm:$0xff]
      %s397 = scalar_lea.vmem %s5, %s361
      %v398 = vld [vmem:[%s397] sm:$0x3f]
      %v399 = vld [vmem:[%s344] sm:$0xff]
      %v400 = vld [vmem:[%s344 + $0x8] sm:$0xff]
      %v401 = vld [vmem:[%s344 + $0x10] sm:$0xff]
      %v402 = vld [vmem:[%s344 + $0x18] sm:$0xff]
      %v403 = vld [vmem:[%s344 + $0x20] sm:$0xff]
      %v404 = vld [vmem:[%s344 + $0x28] sm:$0xff]
      %v406 = vperm.slane %v398, 0
      %v407 = vperm.slane %v398, 1
      %v408 = vperm.slane %v398, 2
      %v409 = vperm.slane %v398, 3
      %v410 = vperm.slane %v398, 4
      %v411 = vperm.slane %v398, 5
      %v418 = vmul.f32 %v399, %v406
      %v419 = vmul.f32 %v400, %v407
      %v420 = vmul.f32 %v401, %v408
      %v421 = vmul.f32 %v402, %v409
      %v422 = vmul.f32 %v403, %v410
      %v423 = vmul.f32 %v404, %v411
      %v424 = vadd.f32 %v418, %v419
      %v425 = vadd.f32 %v420, %v421
      %v426 = vadd.f32 %v422, %v423
      %v427 = vadd.f32 %v424, %v425
      %v428 = vadd.f32 %v427, %v426
      %v429 = vadd.f32 %v396, %v428
      %430 = vst [vmem:[#allocation3] sm:$0xff] %v429
      // Predicated region
      $region49: #{multi_physnet_forward.2} parent=43 // pred_check
        %p431 = pneg %p354
      $region50: #{multi_physnet_forward.2} parent=43 // pred_check_branch
        %433 = sbr.rel (%p431) target = $region52
      $region51: #{multi_physnet_forward.2} parent=43 // pred_region
        %v434 = vld [vmem:[#allocation2] sm:$0xff]
        %435 = vadd.xlane.f32.xlu0 %v434
        %v436 = vpop.xlane.xlu0 %435
        %v437 = vld [vmem:[#allocation3] sm:$0xff]
        %438 = vadd.xlane.f32.xlu0 %v437
        %v439 = vpop.xlane.xlu0 %438
        %s440 = sld [smem:[#allocation4]]
        %v441 = vstv %s440
        %v442 = vadd.f32 %v436, %v441
        %vm443 = vcmask 7168
        %444 = vst.msk [vmem:[%s349] sm:$0xff] %vm443, %v442
        %s445 = sld [smem:[#allocation5]]
        %v446 = vstv %s445
        %v447 = vadd.f32 %v439, %v446
        %448 = vst.msk [vmem:[%s353] sm:$0xff] %vm443, %v447
      $region52: #{multi_physnet_forward.2} parent=43 // pred_fallthru
        _
      %p449 = scmp.lt.s32.totalorder %s25, 1
      %s450 = scalar_select %p449, %s25, 1
      %s451 = smul.addr %s450, 8
      %s452 = scalar_lea.vmem %s6, %s451
      %p453 = scmp.lt.s32.totalorder %s25, 1
      %s454 = scalar_select %p453, %s25, 1
      %s455 = smul.addr %s454, 8
      %s456 = scalar_lea.vmem %s7, %s455
      // Predicated region
      $region53: #{multi_physnet_forward.2} parent=43 // pred_check
        %p457 = pneg %p191
      $region54: #{multi_physnet_forward.2} parent=43 // pred_check_branch
        %459 = sbr.rel (%p457) target = $region56
      $region55: #{multi_physnet_forward.2} parent=43 // pred_region
        _
      $region56: #{multi_physnet_forward.2} parent=43 // pred_fallthru
        _
      // Predicated region
      $region57: #{multi_physnet_forward.2} parent=43 // pred_check
        %p460 = pneg %p217
      $region58: #{multi_physnet_forward.2} parent=43 // pred_check_branch
        %462 = sbr.rel (%p460) target = $region60
      $region59: #{multi_physnet_forward.2} parent=43 // pred_region
        _
      $region60: #{multi_physnet_forward.2} parent=43 // pred_fallthru
        _
    $region44: #{multi_physnet_forward.2} parent=5 // pred_fallthru
      _
    %p463 = scmp.le.s32.totalorder 2, %s16
    // Predicated region
    $region61: #{multi_physnet_forward.2} parent=5 // pred_check
      %p464 = pneg %p463
    $region62: #{multi_physnet_forward.2} parent=5 // pred_check_branch
      %466 = sbr.rel (%p464) target = $region64
    $region63: #{multi_physnet_forward.2} parent=5 // pred_region
      %s467 = ssub.s32 %s16, 2
      // Predicated region
      $region65: #{multi_physnet_forward.2} parent=63 // pred_check
        %p468 = pneg %p197
      $region66: #{multi_physnet_forward.2} parent=63 // pred_check_branch
        %470 = sbr.rel (%p468) target = $region68
      $region67: #{multi_physnet_forward.2} parent=63 // pred_region
        %p471 = scmp.lt.s32.totalorder %s27, 1
        %s472 = scalar_select %p471, %s27, 1
        %s473 = smul.addr %s472, 8
        %s474 = scalar_lea.vmem %s6, %s473
      $region68: #{multi_physnet_forward.2} parent=63 // pred_fallthru
        _
      // Predicated region
      $region69: #{multi_physnet_forward.2} parent=63 // pred_check
        %p475 = pneg %p223
      $region70: #{multi_physnet_forward.2} parent=63 // pred_check_branch
        %477 = sbr.rel (%p475) target = $region72
      $region71: #{multi_physnet_forward.2} parent=63 // pred_region
        %p478 = scmp.lt.s32.totalorder %s27, 1
        %s479 = scalar_select %p478, %s27, 1
        %s480 = smul.addr %s479, 8
        %s481 = scalar_lea.vmem %s7, %s480
      $region72: #{multi_physnet_forward.2} parent=63 // pred_fallthru
        _
    $region64: #{multi_physnet_forward.2} parent=5 // pred_fallthru
      _
  $region6: #{multi_physnet_forward.2} parent=0 // loop_footer
    %s20 = sadd.s32 1, %s16
  $region7: #{multi_physnet_forward.2} parent=0 // loop_footer_branch
    %15 = sbr.rel target = $region3
  $region8: #{multi_physnet_forward.2} parent=0 // loop_exit
    _

// kernel: multi_physnet_forward.3
$region0: #{multi_physnet_forward.3}
  #allocation0 [shape = 'u32[]', space=smem, size = 0x4, offset = 0x4, fixed_abs, tag = 'smem constant byte address 0x4 - core index']
  #allocation1 [shape = 'u32[72,128]{1,0:T(1,128)}', space=vmem, size = 0x9000, scoped, tag = 'internal scratch']
  %s0 = inlined_call_operand.vmem [shape: f32[2,8], index: 0, kind: input, shape index: {}]
  %s1 = inlined_call_operand.vmem [shape: f32[2,8], index: 1, kind: input, shape index: {}]
  %s2 = inlined_call_operand.vmem [shape: f32[8,1024], index: 2, kind: input, shape index: {}]
  %s3 = inlined_call_operand.vmem [shape: f32[8,1024], index: 3, kind: input, shape index: {}]
  %s4 = inlined_call_operand.vmem [shape: f32[1,1024], index: 4, kind: input, shape index: {}]
  %s5 = inlined_call_operand.vmem [shape: f32[512,4], index: 5, kind: input, shape index: {}]
  %s6 = inlined_call_operand.vmem [shape: f32[1,4], index: 6, kind: input, shape index: {}]
  %s7 = inlined_call_operand.vmem [shape: f32[512,3], index: 7, kind: input, shape index: {}]
  %s8 = inlined_call_operand.vmem [shape: f32[1,3], index: 8, kind: input, shape index: {}]
  %s9 = inlined_call_operand.hbm [shape: f32[2,4], index: 9, kind: output, shape index: {0}]
  %s10 = inlined_call_operand.hbm [shape: f32[2,3], index: 10, kind: output, shape index: {1}]
  %11 = xla_tuple %s9, %s10
  %s12 = sld [smem:[#allocation0]]
  $region54: #{multi_physnet_forward.3} parent=0
    _
  %s14 = ssub.s32 1, %s12
  %s15 = scalar_select 0, %s14, %s12
  $region1: #{multi_physnet_forward.3} parent=0
    #allocation2 [shape = 'u8[1024]{0}', space=vmem, size = 0x400, scoped, tag = 'output window, operand 0, single buffered']
    #allocation3 [shape = 's32[1]{0}', space=sflag, size = 0x4, scoped, tag = 'scoped memory for multi_physnet_forward.3']
    #allocation4 [shape = 'u8[1024]{0}', space=vmem, size = 0x400, scoped, tag = 'output window, operand 1, single buffered']
    #allocation5 [shape = 's32[1]{0}', space=sflag, size = 0x4, scoped, tag = 'scoped memory for multi_physnet_forward.3']
    %16 = vsyncpa [#allocation3], 0
    %17 = vsyncpa [#allocation5], 0
    // Predicated region
    $region2: #{multi_physnet_forward.3} parent=1 // pred_check
      _
    $region3: #{multi_physnet_forward.3} parent=1 // pred_check_branch
      %19 = sbr.rel (0) target = $region5
    $region4: #{multi_physnet_forward.3} parent=1 // pred_region
      _
    $region5: #{multi_physnet_forward.3} parent=1 // pred_fallthru
      _
    // Predicated region
    $region6: #{multi_physnet_forward.3} parent=1 // pred_check
      _
    $region7: #{multi_physnet_forward.3} parent=1 // pred_check_branch
      %21 = sbr.rel (0) target = $region9
    $region8: #{multi_physnet_forward.3} parent=1 // pred_region
      _
    $region9: #{multi_physnet_forward.3} parent=1 // pred_fallthru
      _
    // Predicated region
    $region10: #{multi_physnet_forward.3} parent=1 // pred_check
      _
    $region11: #{multi_physnet_forward.3} parent=1 // pred_check_branch
      %23 = sbr.rel (0) target = $region13
    $region12: #{multi_physnet_forward.3} parent=1 // pred_region
      _
    $region13: #{multi_physnet_forward.3} parent=1 // pred_fallthru
      _
    // Predicated region
    $region14: #{multi_physnet_forward.3} parent=1 // pred_check
      _
    $region15: #{multi_physnet_forward.3} parent=1 // pred_check_branch
      %25 = sbr.rel (0) target = $region17
    $region16: #{multi_physnet_forward.3} parent=1 // pred_region
      _
    $region17: #{multi_physnet_forward.3} parent=1 // pred_fallthru
      _
    // Predicated region
    $region18: #{multi_physnet_forward.3} parent=1 // pred_check
      _
    $region19: #{multi_physnet_forward.3} parent=1 // pred_check_branch
      %27 = sbr.rel (0) target = $region21
    $region20: #{multi_physnet_forward.3} parent=1 // pred_region
      _
    $region21: #{multi_physnet_forward.3} parent=1 // pred_fallthru
      _
    // Predicated region
    $region22: #{multi_physnet_forward.3} parent=1 // pred_check
      _
    $region23: #{multi_physnet_forward.3} parent=1 // pred_check_branch
      %29 = sbr.rel (0) target = $region25
    $region24: #{multi_physnet_forward.3} parent=1 // pred_region
      _
    $region25: #{multi_physnet_forward.3} parent=1 // pred_fallthru
      _
    // Predicated region
    $region26: #{multi_physnet_forward.3} parent=1 // pred_check
      _
    $region27: #{multi_physnet_forward.3} parent=1 // pred_check_branch
      %31 = sbr.rel (0) target = $region29
    $region28: #{multi_physnet_forward.3} parent=1 // pred_region
      _
    $region29: #{multi_physnet_forward.3} parent=1 // pred_fallthru
      _
    // Predicated region
    $region30: #{multi_physnet_forward.3} parent=1 // pred_check
      _
    $region31: #{multi_physnet_forward.3} parent=1 // pred_check_branch
      %33 = sbr.rel (0) target = $region33
    $region32: #{multi_physnet_forward.3} parent=1 // pred_region
      _
    $region33: #{multi_physnet_forward.3} parent=1 // pred_fallthru
      _
    // Predicated region
    $region34: #{multi_physnet_forward.3} parent=1 // pred_check
      _
    $region35: #{multi_physnet_forward.3} parent=1 // pred_check_branch
      %35 = sbr.rel (0) target = $region37
    $region36: #{multi_physnet_forward.3} parent=1 // pred_region
      _
    $region37: #{multi_physnet_forward.3} parent=1 // pred_fallthru
      _
    %v36 = vld [vmem:[%s0] sm:$0x3]
    %v37 = vld [vmem:[%s2] sm:$0xff]
    %v38 = vld [vmem:[%s2 + $0x8] sm:$0xff]
    %v39 = vld [vmem:[%s2 + $0x10] sm:$0xff]
    %v40 = vld [vmem:[%s2 + $0x18] sm:$0xff]
    %v41 = vld [vmem:[%s2 + $0x20] sm:$0xff]
    %v42 = vld [vmem:[%s2 + $0x28] sm:$0xff]
    %v43 = vld [vmem:[%s2 + $0x30] sm:$0xff]
    %v44 = vld [vmem:[%s2 + $0x38] sm:$0xff]
    %v45 = vld [vmem:[%s1] sm:$0x3]
    %v46 = vld [vmem:[%s3] sm:$0xff]
    %v47 = vld [vmem:[%s3 + $0x8] sm:$0xff]
    %v48 = vld [vmem:[%s3 + $0x10] sm:$0xff]
    %v49 = vld [vmem:[%s3 + $0x18] sm:$0xff]
    %v50 = vld [vmem:[%s3 + $0x20] sm:$0xff]
    %v51 = vld [vmem:[%s3 + $0x28] sm:$0xff]
    %v52 = vld [vmem:[%s3 + $0x30] sm:$0xff]
    %v53 = vld [vmem:[%s3 + $0x38] sm:$0xff]
    %vm54 = vcmask 64512
    %v56 = vsel %vm54, %v45, 0
    %58 = vmatpush.msra.mxu0 0.0
    %59 = vmatpush.msra.mxu0 0.0
    %60 = vmatpush.msra.mxu0 0.0
    %61 = vmatpush.msra.mxu0 0.0
    %62 = vmatpush.msra.mxu0 0.0
    %63 = vmatpush.msra.mxu0 0.0
    %64 = vmatpush.msra.mxu0 0.0
    %65 = vmatpush.msra.mxu0 0.0
    %66 = vmatpush.msra.mxu0 0.0
    %67 = vmatpush.msra.mxu0 0.0
    %68 = vmatpush.msra.mxu0 0.0
    %69 = vmatpush.msra.mxu0 0.0
    %70 = vmatpush.msra.mxu0 0.0
    %71 = vmatpush.msra.mxu0 0.0
    %72 = vmatpush.msra.mxu0 0.0
    %73 = vmatpush.msra.mxu0 %v46
    %74 = vmatmul.f32.gmra.mxu0 %v56
    %v75 = vpop.f32.mrf.mxu0
    %v76 = vadd.f32 0.0, %v75
    %77 = vdwg.mxu0
    %78 = vmatpush.msra.mxu0 0.0
    %79 = vmatpush.msra.mxu0 0.0
    %80 = vmatpush.msra.mxu0 0.0
    %81 = vmatpush.msra.mxu0 0.0
    %82 = vmatpush.msra.mxu0 0.0
    %83 = vmatpush.msra.mxu0 0.0
    %84 = vmatpush.msra.mxu0 0.0
    %85 = vmatpush.msra.mxu0 0.0
    %86 = vmatpush.msra.mxu0 0.0
    %87 = vmatpush.msra.mxu0 0.0
    %88 = vmatpush.msra.mxu0 0.0
    %89 = vmatpush.msra.mxu0 0.0
    %90 = vmatpush.msra.mxu0 0.0
    %91 = vmatpush.msra.mxu0 0.0
    %92 = vmatpush.msra.mxu0 0.0
    %93 = vmatpush.msra.mxu0 %v47
    %94 = vmatmul.f32.gmra.mxu0 %v56
    %v95 = vpop.f32.mrf.mxu0
    %v96 = vadd.f32 0.0, %v95
    %97 = vdwg.mxu0
    %98 = vmatpush.msra.mxu0 0.0
    %99 = vmatpush.msra.mxu0 0.0
    %100 = vmatpush.msra.mxu0 0.0
    %101 = vmatpush.msra.mxu0 0.0
    %102 = vmatpush.msra.mxu0 0.0
    %103 = vmatpush.msra.mxu0 0.0
    %104 = vmatpush.msra.mxu0 0.0
    %105 = vmatpush.msra.mxu0 0.0
    %106 = vmatpush.msra.mxu0 0.0
    %107 = vmatpush.msra.mxu0 0.0
    %108 = vmatpush.msra.mxu0 0.0
    %109 = vmatpush.msra.mxu0 0.0
    %110 = vmatpush.msra.mxu0 0.0
    %111 = vmatpush.msra.mxu0 0.0
    %112 = vmatpush.msra.mxu0 0.0
    %113 = vmatpush.msra.mxu0 %v48
    %114 = vmatmul.f32.gmra.mxu0 %v56
    %v115 = vpop.f32.mrf.mxu0
    %v116 = vadd.f32 0.0, %v115
    %117 = vdwg.mxu0
    %118 = vmatpush.msra.mxu0 0.0
    %119 = vmatpush.msra.mxu0 0.0
    %120 = vmatpush.msra.mxu0 0.0
    %121 = vmatpush.msra.mxu0 0.0
    %122 = vmatpush.msra.mxu0 0.0
    %123 = vmatpush.msra.mxu0 0.0
    %124 = vmatpush.msra.mxu0 0.0
    %125 = vmatpush.msra.mxu0 0.0
    %126 = vmatpush.msra.mxu0 0.0
    %127 = vmatpush.msra.mxu0 0.0
    %128 = vmatpush.msra.mxu0 0.0
    %129 = vmatpush.msra.mxu0 0.0
    %130 = vmatpush.msra.mxu0 0.0
    %131 = vmatpush.msra.mxu0 0.0
    %132 = vmatpush.msra.mxu0 0.0
    %133 = vmatpush.msra.mxu0 %v49
    %134 = vmatmul.f32.gmra.mxu0 %v56
    %v135 = vpop.f32.mrf.mxu0
    %v136 = vadd.f32 0.0, %v135
    %137 = vdwg.mxu0
    %138 = vmatpush.msra.mxu0 0.0
    %139 = vmatpush.msra.mxu0 0.0
    %140 = vmatpush.msra.mxu0 0.0
    %141 = vmatpush.msra.mxu0 0.0
    %142 = vmatpush.msra.mxu0 0.0
    %143 = vmatpush.msra.mxu0 0.0
    %144 = vmatpush.msra.mxu0 0.0
    %145 = vmatpush.msra.mxu0 0.0
    %146 = vmatpush.msra.mxu0 0.0
    %147 = vmatpush.msra.mxu0 0.0
    %148 = vmatpush.msra.mxu0 0.0
    %149 = vmatpush.msra.mxu0 0.0
    %150 = vmatpush.msra.mxu0 0.0
    %151 = vmatpush.msra.mxu0 0.0
    %152 = vmatpush.msra.mxu0 0.0
    %153 = vmatpush.msra.mxu0 %v50
    %154 = vmatmul.f32.gmra.mxu0 %v56
    %v155 = vpop.f32.mrf.mxu0
    %v156 = vadd.f32 0.0, %v155
    %157 = vdwg.mxu0
    %158 = vmatpush.msra.mxu0 0.0
    %159 = vmatpush.msra.mxu0 0.0
    %160 = vmatpush.msra.mxu0 0.0
    %161 = vmatpush.msra.mxu0 0.0
    %162 = vmatpush.msra.mxu0 0.0
    %163 = vmatpush.msra.mxu0 0.0
    %164 = vmatpush.msra.mxu0 0.0
    %165 = vmatpush.msra.mxu0 0.0
    %166 = vmatpush.msra.mxu0 0.0
    %167 = vmatpush.msra.mxu0 0.0
    %168 = vmatpush.msra.mxu0 0.0
    %169 = vmatpush.msra.mxu0 0.0
    %170 = vmatpush.msra.mxu0 0.0
    %171 = vmatpush.msra.mxu0 0.0
    %172 = vmatpush.msra.mxu0 0.0
    %173 = vmatpush.msra.mxu0 %v51
    %174 = vmatmul.f32.gmra.mxu0 %v56
    %v175 = vpop.f32.mrf.mxu0
    %v176 = vadd.f32 0.0, %v175
    %177 = vdwg.mxu0
    %178 = vmatpush.msra.mxu0 0.0
    %179 = vmatpush.msra.mxu0 0.0
    %180 = vmatpush.msra.mxu0 0.0
    %181 = vmatpush.msra.mxu0 0.0
    %182 = vmatpush.msra.mxu0 0.0
    %183 = vmatpush.msra.mxu0 0.0
    %184 = vmatpush.msra.mxu0 0.0
    %185 = vmatpush.msra.mxu0 0.0
    %186 = vmatpush.msra.mxu0 0.0
    %187 = vmatpush.msra.mxu0 0.0
    %188 = vmatpush.msra.mxu0 0.0
    %189 = vmatpush.msra.mxu0 0.0
    %190 = vmatpush.msra.mxu0 0.0
    %191 = vmatpush.msra.mxu0 0.0
    %192 = vmatpush.msra.mxu0 0.0
    %193 = vmatpush.msra.mxu0 %v52
    %194 = vmatmul.f32.gmra.mxu0 %v56
    %v195 = vpop.f32.mrf.mxu0
    %v196 = vadd.f32 0.0, %v195
    %197 = vdwg.mxu0
    %198 = vmatpush.msra.mxu0 0.0
    %199 = vmatpush.msra.mxu0 0.0
    %200 = vmatpush.msra.mxu0 0.0
    %201 = vmatpush.msra.mxu0 0.0
    %202 = vmatpush.msra.mxu0 0.0
    %203 = vmatpush.msra.mxu0 0.0
    %204 = vmatpush.msra.mxu0 0.0
    %205 = vmatpush.msra.mxu0 0.0
    %206 = vmatpush.msra.mxu0 0.0
    %207 = vmatpush.msra.mxu0 0.0
    %208 = vmatpush.msra.mxu0 0.0
    %209 = vmatpush.msra.mxu0 0.0
    %210 = vmatpush.msra.mxu0 0.0
    %211 = vmatpush.msra.mxu0 0.0
    %212 = vmatpush.msra.mxu0 0.0
    %213 = vmatpush.msra.mxu0 %v53
    %214 = vmatmul.f32.gmra.mxu0 %v56
    %v215 = vpop.f32.mrf.mxu0
    %v216 = vadd.f32 0.0, %v215
    %217 = vdwg.mxu0
    %v219 = vsel %vm54, %v36, 0
    %221 = vmatpush.msra.mxu0 0.0
    %222 = vmatpush.msra.mxu0 0.0
    %223 = vmatpush.msra.mxu0 0.0
    %224 = vmatpush.msra.mxu0 0.0
    %225 = vmatpush.msra.mxu0 0.0
    %226 = vmatpush.msra.mxu0 0.0
    %227 = vmatpush.msra.mxu0 0.0
    %228 = vmatpush.msra.mxu0 0.0
    %229 = vmatpush.msra.mxu0 0.0
    %230 = vmatpush.msra.mxu0 0.0
    %231 = vmatpush.msra.mxu0 0.0
    %232 = vmatpush.msra.mxu0 0.0
    %233 = vmatpush.msra.mxu0 0.0
    %234 = vmatpush.msra.mxu0 0.0
    %235 = vmatpush.msra.mxu0 0.0
    %236 = vmatpush.msra.mxu0 %v37
    %237 = vmatmul.f32.gmra.mxu0 %v219
    %v238 = vpop.f32.mrf.mxu0
    %v239 = vadd.f32 %v76, %v238
    %240 = vdwg.mxu0
    %241 = vmatpush.msra.mxu0 0.0
    %242 = vmatpush.msra.mxu0 0.0
    %243 = vmatpush.msra.mxu0 0.0
    %244 = vmatpush.msra.mxu0 0.0
    %245 = vmatpush.msra.mxu0 0.0
    %246 = vmatpush.msra.mxu0 0.0
    %247 = vmatpush.msra.mxu0 0.0
    %248 = vmatpush.msra.mxu0 0.0
    %249 = vmatpush.msra.mxu0 0.0
    %250 = vmatpush.msra.mxu0 0.0
    %251 = vmatpush.msra.mxu0 0.0
    %252 = vmatpush.msra.mxu0 0.0
    %253 = vmatpush.msra.mxu0 0.0
    %254 = vmatpush.msra.mxu0 0.0
    %255 = vmatpush.msra.mxu0 0.0
    %256 = vmatpush.msra.mxu0 %v38
    %257 = vmatmul.f32.gmra.mxu0 %v219
    %v258 = vpop.f32.mrf.mxu0
    %v259 = vadd.f32 %v96, %v258
    %260 = vdwg.mxu0
    %261 = vmatpush.msra.mxu0 0.0
    %262 = vmatpush.msra.mxu0 0.0
    %263 = vmatpush.msra.mxu0 0.0
    %264 = vmatpush.msra.mxu0 0.0
    %265 = vmatpush.msra.mxu0 0.0
    %266 = vmatpush.msra.mxu0 0.0
    %267 = vmatpush.msra.mxu0 0.0
    %268 = vmatpush.msra.mxu0 0.0
    %269 = vmatpush.msra.mxu0 0.0
    %270 = vmatpush.msra.mxu0 0.0
    %271 = vmatpush.msra.mxu0 0.0
    %272 = vmatpush.msra.mxu0 0.0
    %273 = vmatpush.msra.mxu0 0.0
    %274 = vmatpush.msra.mxu0 0.0
    %275 = vmatpush.msra.mxu0 0.0
    %276 = vmatpush.msra.mxu0 %v39
    %277 = vmatmul.f32.gmra.mxu0 %v219
    %v278 = vpop.f32.mrf.mxu0
    %v279 = vadd.f32 %v116, %v278
    %280 = vdwg.mxu0
    %281 = vmatpush.msra.mxu0 0.0
    %282 = vmatpush.msra.mxu0 0.0
    %283 = vmatpush.msra.mxu0 0.0
    %284 = vmatpush.msra.mxu0 0.0
    %285 = vmatpush.msra.mxu0 0.0
    %286 = vmatpush.msra.mxu0 0.0
    %287 = vmatpush.msra.mxu0 0.0
    %288 = vmatpush.msra.mxu0 0.0
    %289 = vmatpush.msra.mxu0 0.0
    %290 = vmatpush.msra.mxu0 0.0
    %291 = vmatpush.msra.mxu0 0.0
    %292 = vmatpush.msra.mxu0 0.0
    %293 = vmatpush.msra.mxu0 0.0
    %294 = vmatpush.msra.mxu0 0.0
    %295 = vmatpush.msra.mxu0 0.0
    %296 = vmatpush.msra.mxu0 %v40
    %297 = vmatmul.f32.gmra.mxu0 %v219
    %v298 = vpop.f32.mrf.mxu0
    %v299 = vadd.f32 %v136, %v298
    %300 = vdwg.mxu0
    %301 = vmatpush.msra.mxu0 0.0
    %302 = vmatpush.msra.mxu0 0.0
    %303 = vmatpush.msra.mxu0 0.0
    %304 = vmatpush.msra.mxu0 0.0
    %305 = vmatpush.msra.mxu0 0.0
    %306 = vmatpush.msra.mxu0 0.0
    %307 = vmatpush.msra.mxu0 0.0
    %308 = vmatpush.msra.mxu0 0.0
    %309 = vmatpush.msra.mxu0 0.0
    %310 = vmatpush.msra.mxu0 0.0
    %311 = vmatpush.msra.mxu0 0.0
    %312 = vmatpush.msra.mxu0 0.0
    %313 = vmatpush.msra.mxu0 0.0
    %314 = vmatpush.msra.mxu0 0.0
    %315 = vmatpush.msra.mxu0 0.0
    %316 = vmatpush.msra.mxu0 %v41
    %317 = vmatmul.f32.gmra.mxu0 %v219
    %v318 = vpop.f32.mrf.mxu0
    %v319 = vadd.f32 %v156, %v318
    %320 = vdwg.mxu0
    %321 = vmatpush.msra.mxu0 0.0
    %322 = vmatpush.msra.mxu0 0.0
    %323 = vmatpush.msra.mxu0 0.0
    %324 = vmatpush.msra.mxu0 0.0
    %325 = vmatpush.msra.mxu0 0.0
    %326 = vmatpush.msra.mxu0 0.0
    %327 = vmatpush.msra.mxu0 0.0
    %328 = vmatpush.msra.mxu0 0.0
    %329 = vmatpush.msra.mxu0 0.0
    %330 = vmatpush.msra.mxu0 0.0
    %331 = vmatpush.msra.mxu0 0.0
    %332 = vmatpush.msra.mxu0 0.0
    %333 = vmatpush.msra.mxu0 0.0
    %334 = vmatpush.msra.mxu0 0.0
    %335 = vmatpush.msra.mxu0 0.0
    %336 = vmatpush.msra.mxu0 %v42
    %337 = vmatmul.f32.gmra.mxu0 %v219
    %v338 = vpop.f32.mrf.mxu0
    %v339 = vadd.f32 %v176, %v338
    %340 = vdwg.mxu0
    %341 = vmatpush.msra.mxu0 0.0
    %342 = vmatpush.msra.mxu0 0.0
    %343 = vmatpush.msra.mxu0 0.0
    %344 = vmatpush.msra.mxu0 0.0
    %345 = vmatpush.msra.mxu0 0.0
    %346 = vmatpush.msra.mxu0 0.0
    %347 = vmatpush.msra.mxu0 0.0
    %348 = vmatpush.msra.mxu0 0.0
    %349 = vmatpush.msra.mxu0 0.0
    %350 = vmatpush.msra.mxu0 0.0
    %351 = vmatpush.msra.mxu0 0.0
    %352 = vmatpush.msra.mxu0 0.0
    %353 = vmatpush.msra.mxu0 0.0
    %354 = vmatpush.msra.mxu0 0.0
    %355 = vmatpush.msra.mxu0 0.0
    %356 = vmatpush.msra.mxu0 %v43
    %357 = vmatmul.f32.gmra.mxu0 %v219
    %v358 = vpop.f32.mrf.mxu0
    %v359 = vadd.f32 %v196, %v358
    %360 = vdwg.mxu0
    %361 = vmatpush.msra.mxu0 0.0
    %362 = vmatpush.msra.mxu0 0.0
    %363 = vmatpush.msra.mxu0 0.0
    %364 = vmatpush.msra.mxu0 0.0
    %365 = vmatpush.msra.mxu0 0.0
    %366 = vmatpush.msra.mxu0 0.0
    %367 = vmatpush.msra.mxu0 0.0
    %368 = vmatpush.msra.mxu0 0.0
    %369 = vmatpush.msra.mxu0 0.0
    %370 = vmatpush.msra.mxu0 0.0
    %371 = vmatpush.msra.mxu0 0.0
    %372 = vmatpush.msra.mxu0 0.0
    %373 = vmatpush.msra.mxu0 0.0
    %374 = vmatpush.msra.mxu0 0.0
    %375 = vmatpush.msra.mxu0 0.0
    %376 = vmatpush.msra.mxu0 %v44
    %377 = vmatmul.f32.gmra.mxu0 %v219
    %v378 = vpop.f32.mrf.mxu0
    %v379 = vadd.f32 %v216, %v378
    %380 = vdwg.mxu0
    %v381 = vld [vmem:[%s4] sm:$0xff]
    %v383 = vperm.slane %v381, 0
    %v384 = vperm.slane %v381, 1
    %v385 = vperm.slane %v381, 2
    %v386 = vperm.slane %v381, 3
    %v387 = vperm.slane %v381, 4
    %v388 = vperm.slane %v381, 5
    %v389 = vperm.slane %v381, 6
    %v390 = vperm.slane %v381, 7
    %v399 = vadd.f32 %v239, %v383
    %v400 = vadd.f32 %v259, %v384
    %v401 = vadd.f32 %v279, %v385
    %v402 = vadd.f32 %v299, %v386
    %v403 = vadd.f32 %v319, %v387
    %v404 = vadd.f32 %v339, %v388
    %v405 = vadd.f32 %v359, %v389
    %v406 = vadd.f32 %v379, %v390
    %v407 = vmax.f32 %v399, 0.0
    %v408 = vmax.f32 %v400, 0.0
    %v409 = vmax.f32 %v401, 0.0
    %v410 = vmax.f32 %v402, 0.0
    %v411 = vmax.f32 %v403, 0.0
    %v412 = vmax.f32 %v404, 0.0
    %v413 = vmax.f32 %v405, 0.0
    %v414 = vmax.f32 %v406, 0.0
    %v415 = vld [vmem:[%s5] sm:$0xff]
    %v416 = vld [vmem:[%s5 + $0x8] sm:$0xff]
    %v417 = vld [vmem:[%s5 + $0x10] sm:$0xff]
    %v418 = vld [vmem:[%s5 + $0x18] sm:$0xff]
    %v419 = vld [vmem:[%s5 + $0x20] sm:$0xff]
    %v420 = vld [vmem:[%s5 + $0x28] sm:$0xff]
    %v421 = vld [vmem:[%s5 + $0x30] sm:$0xff]
    %v422 = vld [vmem:[%s5 + $0x38] sm:$0xff]
    %v423 = vld [vmem:[%s5 + $0x40] sm:$0xff]
    %v424 = vld [vmem:[%s5 + $0x48] sm:$0xff]
    %v425 = vld [vmem:[%s5 + $0x50] sm:$0xff]
    %v426 = vld [vmem:[%s5 + $0x58] sm:$0xff]
    %v427 = vld [vmem:[%s5 + $0x60] sm:$0xff]
    %v428 = vld [vmem:[%s5 + $0x68] sm:$0xff]
    %v429 = vld [vmem:[%s5 + $0x70] sm:$0xff]
    %v430 = vld [vmem:[%s5 + $0x78] sm:$0xff]
    %v431 = vld [vmem:[%s5 + $0x80] sm:$0xff]
    %v432 = vld [vmem:[%s5 + $0x88] sm:$0xff]
    %v433 = vld [vmem:[%s5 + $0x90] sm:$0xff]
    %v434 = vld [vmem:[%s5 + $0x98] sm:$0xff]
    %v435 = vld [vmem:[%s5 + $0xa0] sm:$0xff]
    %v436 = vld [vmem:[%s5 + $0xa8] sm:$0xff]
    %v437 = vld [vmem:[%s5 + $0xb0] sm:$0xff]
    %v438 = vld [vmem:[%s5 + $0xb8] sm:$0xff]
    %v439 = vld [vmem:[%s5 + $0xc0] sm:$0xff]
    %v440 = vld [vmem:[%s5 + $0xc8] sm:$0xff]
    %v441 = vld [vmem:[%s5 + $0xd0] sm:$0xff]
    %v442 = vld [vmem:[%s5 + $0xd8] sm:$0xff]
    %v443 = vld [vmem:[%s5 + $0xe0] sm:$0xff]
    %v444 = vld [vmem:[%s5 + $0xe8] sm:$0xff]
    %v445 = vld [vmem:[%s5 + $0xf0] sm:$0xff]
    %v446 = vld [vmem:[%s5 + $0xf8] sm:$0xff]
    %v447 = vld [vmem:[%s5 + $0x100] sm:$0xff]
    %v448 = vld [vmem:[%s5 + $0x108] sm:$0xff]
    %v449 = vld [vmem:[%s5 + $0x110] sm:$0xff]
    %v450 = vld [vmem:[%s5 + $0x118] sm:$0xff]
    %v451 = vld [vmem:[%s5 + $0x120] sm:$0xff]
    %v452 = vld [vmem:[%s5 + $0x128] sm:$0xff]
    %v453 = vld [vmem:[%s5 + $0x130] sm:$0xff]
    %v454 = vld [vmem:[%s5 + $0x138] sm:$0xff]
    %v455 = vld [vmem:[%s5 + $0x140] sm:$0xff]
    %v456 = vld [vmem:[%s5 + $0x148] sm:$0xff]
    %v457 = vld [vmem:[%s5 + $0x150] sm:$0xff]
    %v458 = vld [vmem:[%s5 + $0x158] sm:$0xff]
    %v459 = vld [vmem:[%s5 + $0x160] sm:$0xff]
    %v460 = vld [vmem:[%s5 + $0x168] sm:$0xff]
    %v461 = vld [vmem:[%s5 + $0x170] sm:$0xff]
    %v462 = vld [vmem:[%s5 + $0x178] sm:$0xff]
    %v463 = vld [vmem:[%s5 + $0x180] sm:$0xff]
    %v464 = vld [vmem:[%s5 + $0x188] sm:$0xff]
    %v465 = vld [vmem:[%s5 + $0x190] sm:$0xff]
    %v466 = vld [vmem:[%s5 + $0x198] sm:$0xff]
    %v467 = vld [vmem:[%s5 + $0x1a0] sm:$0xff]
    %v468 = vld [vmem:[%s5 + $0x1a8] sm:$0xff]
    %v469 = vld [vmem:[%s5 + $0x1b0] sm:$0xff]
    %v470 = vld [vmem:[%s5 + $0x1b8] sm:$0xff]
    %v471 = vld [vmem:[%s5 + $0x1c0] sm:$0xff]
    %v472 = vld [vmem:[%s5 + $0x1c8] sm:$0xff]
    %v473 = vld [vmem:[%s5 + $0x1d0] sm:$0xff]
    %v474 = vld [vmem:[%s5 + $0x1d8] sm:$0xff]
    %v475 = vld [vmem:[%s5 + $0x1e0] sm:$0xff]
    %v476 = vld [vmem:[%s5 + $0x1e8] sm:$0xff]
    %v477 = vld [vmem:[%s5 + $0x1f0] sm:$0xff]
    %v478 = vld [vmem:[%s5 + $0x1f8] sm:$0xff]
    %v479 = vld [vmem:[%s6] sm:$0x1]
    %v481 = vperm.slane %v479, 0
    %483 = vmatpush.msra.mxu0 %v430
    %484 = vmatpush.msra.mxu0 %v429
    %485 = vmatpush.msra.mxu0 %v428
    %486 = vmatpush.msra.mxu0 %v427
    %487 = vmatpush.msra.mxu0 %v426
    %488 = vmatpush.msra.mxu0 %v425
    %489 = vmatpush.msra.mxu0 %v424
    %490 = vmatpush.msra.mxu0 %v423
    %491 = vmatpush.msra.mxu0 %v422
    %492 = vmatpush.msra.mxu0 %v421
    %493 = vmatpush.msra.mxu0 %v420
    %494 = vmatpush.msra.mxu0 %v419
    %495 = vmatpush.msra.mxu0 %v418
    %496 = vmatpush.msra.mxu0 %v417
    %497 = vmatpush.msra.mxu0 %v416
    %498 = vmatpush.msra.mxu0 %v415
    %499 = vmatmul.f32.gmra.mxu0 %v407
    %v500 = vpop.f32.mrf.mxu0
    %v501 = vadd.f32 %v481, %v500
    %502 = vdwg.mxu0
    %503 = vmatpush.msra.mxu0 %v446
    %504 = vmatpush.msra.mxu0 %v445
    %505 = vmatpush.msra.mxu0 %v444
    %506 = vmatpush.msra.mxu0 %v443
    %507 = vmatpush.msra.mxu0 %v442
    %508 = vmatpush.msra.mxu0 %v441
    %509 = vmatpush.msra.mxu0 %v440
    %510 = vmatpush.msra.mxu0 %v439
    %511 = vmatpush.msra.mxu0 %v438
    %512 = vmatpush.msra.mxu0 %v437
    %513 = vmatpush.msra.mxu0 %v436
    %514 = vmatpush.msra.mxu0 %v435
    %515 = vmatpush.msra.mxu0 %v434
    %516 = vmatpush.msra.mxu0 %v433
    %517 = vmatpush.msra.mxu0 %v432
    %518 = vmatpush.msra.mxu0 %v431
    %519 = vmatmul.f32.gmra.mxu0 %v408
    %v520 = vpop.f32.mrf.mxu0
    %v521 = vadd.f32 %v501, %v520
    %522 = vdwg.mxu0
    %523 = vmatpush.msra.mxu0 %v462
    %524 = vmatpush.msra.mxu0 %v461
    %525 = vmatpush.msra.mxu0 %v460
    %526 = vmatpush.msra.mxu0 %v459
    %527 = vmatpush.msra.mxu0 %v458
    %528 = vmatpush.msra.mxu0 %v457
    %529 = vmatpush.msra.mxu0 %v456
    %530 = vmatpush.msra.mxu0 %v455
    %531 = vmatpush.msra.mxu0 %v454
    %532 = vmatpush.msra.mxu0 %v453
    %533 = vmatpush.msra.mxu0 %v452
    %534 = vmatpush.msra.mxu0 %v451
    %535 = vmatpush.msra.mxu0 %v450
    %536 = vmatpush.msra.mxu0 %v449
    %537 = vmatpush.msra.mxu0 %v448
    %538 = vmatpush.msra.mxu0 %v447
    %539 = vmatmul.f32.gmra.mxu0 %v409
    %v540 = vpop.f32.mrf.mxu0
    %v541 = vadd.f32 %v521, %v540
    %542 = vdwg.mxu0
    %543 = vmatpush.msra.mxu0 %v478
    %544 = vmatpush.msra.mxu0 %v477
    %545 = vmatpush.msra.mxu0 %v476
    %546 = vmatpush.msra.mxu0 %v475
    %547 = vmatpush.msra.mxu0 %v474
    %548 = vmatpush.msra.mxu0 %v473
    %549 = vmatpush.msra.mxu0 %v472
    %550 = vmatpush.msra.mxu0 %v471
    %551 = vmatpush.msra.mxu0 %v470
    %552 = vmatpush.msra.mxu0 %v469
    %553 = vmatpush.msra.mxu0 %v468
    %554 = vmatpush.msra.mxu0 %v467
    %555 = vmatpush.msra.mxu0 %v466
    %556 = vmatpush.msra.mxu0 %v465
    %557 = vmatpush.msra.mxu0 %v464
    %558 = vmatpush.msra.mxu0 %v463
    %559 = vmatmul.f32.gmra.mxu0 %v410
    %v560 = vpop.f32.mrf.mxu0
    %v561 = vadd.f32 %v541, %v560
    %562 = vdwg.mxu0
    %vm563 = vcmask 25600
    %564 = vst.msk [vmem:[#allocation2] sm:$0x3] %vm563, %v561
    %v565 = vld [vmem:[%s7] sm:$0xff]
    %v566 = vld [vmem:[%s7 + $0x8] sm:$0xff]
    %v567 = vld [vmem:[%s7 + $0x10] sm:$0xff]
    %v568 = vld [vmem:[%s7 + $0x18] sm:$0xff]
    %v569 = vld [vmem:[%s7 + $0x20] sm:$0xff]
    %v570 = vld [vmem:[%s7 + $0x28] sm:$0xff]
    %v571 = vld [vmem:[%s7 + $0x30] sm:$0xff]
    %v572 = vld [vmem:[%s7 + $0x38] sm:$0xff]
    %v573 = vld [vmem:[%s7 + $0x40] sm:$0xff]
    %v574 = vld [vmem:[%s7 + $0x48] sm:$0xff]
    %v575 = vld [vmem:[%s7 + $0x50] sm:$0xff]
    %v576 = vld [vmem:[%s7 + $0x58] sm:$0xff]
    %v577 = vld [vmem:[%s7 + $0x60] sm:$0xff]
    %v578 = vld [vmem:[%s7 + $0x68] sm:$0xff]
    %v579 = vld [vmem:[%s7 + $0x70] sm:$0xff]
    %v580 = vld [vmem:[%s7 + $0x78] sm:$0xff]
    %v581 = vld [vmem:[%s7 + $0x80] sm:$0xff]
    %v582 = vld [vmem:[%s7 + $0x88] sm:$0xff]
    %v583 = vld [vmem:[%s7 + $0x90] sm:$0xff]
    %v584 = vld [vmem:[%s7 + $0x98] sm:$0xff]
    %v585 = vld [vmem:[%s7 + $0xa0] sm:$0xff]
    %v586 = vld [vmem:[%s7 + $0xa8] sm:$0xff]
    %v587 = vld [vmem:[%s7 + $0xb0] sm:$0xff]
    %v588 = vld [vmem:[%s7 + $0xb8] sm:$0xff]
    %v589 = vld [vmem:[%s7 + $0xc0] sm:$0xff]
    %v590 = vld [vmem:[%s7 + $0xc8] sm:$0xff]
    %v591 = vld [vmem:[%s7 + $0xd0] sm:$0xff]
    %v592 = vld [vmem:[%s7 + $0xd8] sm:$0xff]
    %v593 = vld [vmem:[%s7 + $0xe0] sm:$0xff]
    %v594 = vld [vmem:[%s7 + $0xe8] sm:$0xff]
    %v595 = vld [vmem:[%s7 + $0xf0] sm:$0xff]
    %v596 = vld [vmem:[%s7 + $0xf8] sm:$0xff]
    %v597 = vld [vmem:[%s7 + $0x100] sm:$0xff]
    %v598 = vld [vmem:[%s7 + $0x108] sm:$0xff]
    %v599 = vld [vmem:[%s7 + $0x110] sm:$0xff]
    %v600 = vld [vmem:[%s7 + $0x118] sm:$0xff]
    %v601 = vld [vmem:[%s7 + $0x120] sm:$0xff]
    %v602 = vld [vmem:[%s7 + $0x128] sm:$0xff]
    %v603 = vld [vmem:[%s7 + $0x130] sm:$0xff]
    %v604 = vld [vmem:[%s7 + $0x138] sm:$0xff]
    %v605 = vld [vmem:[%s7 + $0x140] sm:$0xff]
    %v606 = vld [vmem:[%s7 + $0x148] sm:$0xff]
    %v607 = vld [vmem:[%s7 + $0x150] sm:$0xff]
    %v608 = vld [vmem:[%s7 + $0x158] sm:$0xff]
    %v609 = vld [vmem:[%s7 + $0x160] sm:$0xff]
    %v610 = vld [vmem:[%s7 + $0x168] sm:$0xff]
    %v611 = vld [vmem:[%s7 + $0x170] sm:$0xff]
    %v612 = vld [vmem:[%s7 + $0x178] sm:$0xff]
    %v613 = vld [vmem:[%s7 + $0x180] sm:$0xff]
    %v614 = vld [vmem:[%s7 + $0x188] sm:$0xff]
    %v615 = vld [vmem:[%s7 + $0x190] sm:$0xff]
    %v616 = vld [vmem:[%s7 + $0x198] sm:$0xff]
    %v617 = vld [vmem:[%s7 + $0x1a0] sm:$0xff]
    %v618 = vld [vmem:[%s7 + $0x1a8] sm:$0xff]
    %v619 = vld [vmem:[%s7 + $0x1b0] sm:$0xff]
    %v620 = vld [vmem:[%s7 + $0x1b8] sm:$0xff]
    %v621 = vld [vmem:[%s7 + $0x1c0] sm:$0xff]
    %v622 = vld [vmem:[%s7 + $0x1c8] sm:$0xff]
    %v623 = vld [vmem:[%s7 + $0x1d0] sm:$0xff]
    %v624 = vld [vmem:[%s7 + $0x1d8] sm:$0xff]
    %v625 = vld [vmem:[%s7 + $0x1e0] sm:$0xff]
    %v626 = vld [vmem:[%s7 + $0x1e8] sm:$0xff]
    %v627 = vld [vmem:[%s7 + $0x1f0] sm:$0xff]
    %v628 = vld [vmem:[%s7 + $0x1f8] sm:$0xff]
    %v629 = vld [vmem:[%s8] sm:$0x1]
    %v631 = vperm.slane %v629, 0
    %633 = vmatpush.msra.mxu0 %v580
    %634 = vmatpush.msra.mxu0 %v579
    %635 = vmatpush.msra.mxu0 %v578
    %636 = vmatpush.msra.mxu0 %v577
    %637 = vmatpush.msra.mxu0 %v576
    %638 = vmatpush.msra.mxu0 %v575
    %639 = vmatpush.msra.mxu0 %v574
    %640 = vmatpush.msra.mxu0 %v573
    %641 = vmatpush.msra.mxu0 %v572
    %642 = vmatpush.msra.mxu0 %v571
    %643 = vmatpush.msra.mxu0 %v570
    %644 = vmatpush.msra.mxu0 %v569
    %645 = vmatpush.msra.mxu0 %v568
    %646 = vmatpush.msra.mxu0 %v567
    %647 = vmatpush.msra.mxu0 %v566
    %648 = vmatpush.msra.mxu0 %v565
    %649 = vmatmul.f32.gmra.mxu0 %v411
    %v650 = vpop.f32.mrf.mxu0
    %v651 = vadd.f32 %v631, %v650
    %652 = vdwg.mxu0
    %653 = vmatpush.msra.mxu0 %v596
    %654 = vmatpush.msra.mxu0 %v595
    %655 = vmatpush.msra.mxu0 %v594
    %656 = vmatpush.msra.mxu0 %v593
    %657 = vmatpush.msra.mxu0 %v592
    %658 = vmatpush.msra.mxu0 %v591
    %659 = vmatpush.msra.mxu0 %v590
    %660 = vmatpush.msra.mxu0 %v589
    %661 = vmatpush.msra.mxu0 %v588
    %662 = vmatpush.msra.mxu0 %v587
    %663 = vmatpush.msra.mxu0 %v586
    %664 = vmatpush.msra.mxu0 %v585
    %665 = vmatpush.msra.mxu0 %v584
    %666 = vmatpush.msra.mxu0 %v583
    %667 = vmatpush.msra.mxu0 %v582
    %668 = vmatpush.msra.mxu0 %v581
    %669 = vmatmul.f32.gmra.mxu0 %v412
    %v670 = vpop.f32.mrf.mxu0
    %v671 = vadd.f32 %v651, %v670
    %672 = vdwg.mxu0
    %673 = vmatpush.msra.mxu0 %v612
    %674 = vmatpush.msra.mxu0 %v611
    %675 = vmatpush.msra.mxu0 %v610
    %676 = vmatpush.msra.mxu0 %v609
    %677 = vmatpush.msra.mxu0 %v608
    %678 = vmatpush.msra.mxu0 %v607
    %679 = vmatpush.msra.mxu0 %v606
    %680 = vmatpush.msra.mxu0 %v605
    %681 = vmatpush.msra.mxu0 %v604
    %682 = vmatpush.msra.mxu0 %v603
    %683 = vmatpush.msra.mxu0 %v602
    %684 = vmatpush.msra.mxu0 %v601
    %685 = vmatpush.msra.mxu0 %v600
    %686 = vmatpush.msra.mxu0 %v599
    %687 = vmatpush.msra.mxu0 %v598
    %688 = vmatpush.msra.mxu0 %v597
    %689 = vmatmul.f32.gmra.mxu0 %v413
    %v690 = vpop.f32.mrf.mxu0
    %v691 = vadd.f32 %v671, %v690
    %692 = vdwg.mxu0
    %693 = vmatpush.msra.mxu0 %v628
    %694 = vmatpush.msra.mxu0 %v627
    %695 = vmatpush.msra.mxu0 %v626
    %696 = vmatpush.msra.mxu0 %v625
    %697 = vmatpush.msra.mxu0 %v624
    %698 = vmatpush.msra.mxu0 %v623
    %699 = vmatpush.msra.mxu0 %v622
    %700 = vmatpush.msra.mxu0 %v621
    %701 = vmatpush.msra.mxu0 %v620
    %702 = vmatpush.msra.mxu0 %v619
    %703 = vmatpush.msra.mxu0 %v618
    %704 = vmatpush.msra.mxu0 %v617
    %705 = vmatpush.msra.mxu0 %v616
    %706 = vmatpush.msra.mxu0 %v615
    %707 = vmatpush.msra.mxu0 %v614
    %708 = vmatpush.msra.mxu0 %v613
    %709 = vmatmul.f32.gmra.mxu0 %v414
    %v710 = vpop.f32.mrf.mxu0
    %v711 = vadd.f32 %v691, %v710
    %712 = vdwg.mxu0
    %vm713 = vcmask 17408
    %714 = vst.msk [vmem:[#allocation4] sm:$0x3] %vm713, %v711
    // Predicated region
    $region38: #{multi_physnet_forward.3} parent=1 // pred_check
      _
    $region39: #{multi_physnet_forward.3} parent=1 // pred_check_branch
      %716 = sbr.rel (0) target = $region41
    $region40: #{multi_physnet_forward.3} parent=1 // pred_region
      %718 = vsyncadd [#allocation3], 0
      %s720 = sshll.u32 [#allocation2], 4
      %s721 = int_to_ptr.vmem [resolvable:$true] %s720
      %s722 = sshll.u32 %s9, 4
      %s723 = int_to_ptr.hbm [resolvable:$true] %s722
      %725 = dma.vmem_to_hbm [thread:$0]  %s721, 32, %s723, [#allocation3]
    $region41: #{multi_physnet_forward.3} parent=1 // pred_fallthru
      _
    // Predicated region
    $region42: #{multi_physnet_forward.3} parent=1 // pred_check
      _
    $region43: #{multi_physnet_forward.3} parent=1 // pred_check_branch
      %727 = sbr.rel (0) target = $region45
    $region44: #{multi_physnet_forward.3} parent=1 // pred_region
      %729 = vsyncadd [#allocation5], 0
      %s731 = sshll.u32 [#allocation4], 4
      %s732 = int_to_ptr.vmem [resolvable:$true] %s731
      %s733 = sshll.u32 %s10, 4
      %s734 = int_to_ptr.hbm [resolvable:$true] %s733
      %736 = dma.vmem_to_hbm [thread:$0]  %s732, 32, %s734, [#allocation5]
    $region45: #{multi_physnet_forward.3} parent=1 // pred_fallthru
      _
    // Predicated region
    $region46: #{multi_physnet_forward.3} parent=1 // pred_check
      _
    $region47: #{multi_physnet_forward.3} parent=1 // pred_check_branch
      %738 = sbr.rel (0) target = $region49
    $region48: #{multi_physnet_forward.3} parent=1 // pred_region
      %740 = dma.done [#allocation3], 32
    $region49: #{multi_physnet_forward.3} parent=1 // pred_fallthru
      _
    // Predicated region
    $region50: #{multi_physnet_forward.3} parent=1 // pred_check
      _
    $region51: #{multi_physnet_forward.3} parent=1 // pred_check_branch
      %742 = sbr.rel (0) target = $region53
    $region52: #{multi_physnet_forward.3} parent=1 // pred_region
      %744 = dma.done [#allocation5], 32
    $region53: #{multi_physnet_forward.3} parent=1 // pred_fallthru
      _
    %745 = vsyncpa [#allocation3], 1
    %746 = vsyncpa [#allocation5], 1

</llo_original>
